<compile_context>
chip_gen: v6e
topology: v6e:2x2x1
jax: 0.10.0
libtpu: 0.0.40
codegen_flags: <defaults>
</compile_context>

<pallas_src>
import math
import functools

import jax
import jax.numpy as jnp
from jax import lax
from jax.experimental import pallas as pl
from jax.experimental.pallas import tpu as pltpu


def _mha_kernel(num_heads, d_k, scale,
                q_ref, k_ref, v_ref,
                wq_ref, bq_ref, wk_ref, bk_ref,
                wv_ref, bv_ref, wo_ref, bo_ref,
                out_ref, attn_ref):
    # Each grid step handles one (batch, query-tile) pair.
    xq = q_ref[0]            # (TQ, D)
    xk = k_ref[0]            # (S,  D)
    xv = v_ref[0]            # (S,  D)

    # Linear projections on the MXU, f32 accumulate.  Scale folded into q.
    q = (jnp.dot(xq, wq_ref[...], preferred_element_type=jnp.float32)
         + bq_ref[...]) * scale
    k = jnp.dot(xk, wk_ref[...], preferred_element_type=jnp.float32) + bk_ref[...]
    v = jnp.dot(xv, wv_ref[...], preferred_element_type=jnp.float32) + bv_ref[...]

    # Contract the last dim of both operands -> no materialized transpose.
    contract_last = (((1,), (1,)), ((), ()))

    out_acc = None
    for h in range(num_heads):          # static unrolled loop; num_heads small
        lo = h * d_k
        hi = lo + d_k
        qh = q[:, lo:hi]                # (TQ, d_k) static slices
        kh = k[:, lo:hi]                # (S,  d_k)
        vh = v[:, lo:hi]                # (S,  d_k)

        # scores_h = (q_h * scale) @ k_h^T      (TQ, S)
        s = lax.dot_general(qh, kh, contract_last,
                            preferred_element_type=jnp.float32)
        # TODO(synk): optional attention mask (mask==0 -> -1e9) not wired in;
        # the module is exercised with mask=None.
        m = jnp.max(s, axis=-1, keepdims=True)
        e = jnp.exp(s - m)
        p = e * pl.reciprocal(jnp.sum(e, axis=-1, keepdims=True), approx=True)

        attn_ref[0, h] = p              # pre-dropout attention weights
        # TODO(synk): nn.Dropout on attn_weights is identity here (eval mode).

        # context_h @ Wo[rows of head h] accumulated directly -> no concat.
        ctx_h = jnp.dot(p, vh, preferred_element_type=jnp.float32)          # (TQ, d_k)
        part = jnp.dot(ctx_h, wo_ref[lo:hi, :],
                       preferred_element_type=jnp.float32)                  # (TQ, D)
        out_acc = part if out_acc is None else out_acc + part

    out_ref[0] = (out_acc + bo_ref[...]).astype(out_ref.dtype)


def _pick_query_tile(S):
    for cand in (256, 128):             # 256 feeds v6e/v7x MXU; 128 fine for v5e
        if S % cand == 0:
            return cand
    return S                            # small sequences: one tile


def multi_head_attention(query, key, value, params, num_heads):
    """query/key/value: (B, S, D) float32. Returns (output (B,S,D), attn (B,H,S,S))."""
    B, S, D = query.shape
    d_k = D // num_heads
    tq = _pick_query_tile(S)

    # Pre-transpose Linear weights so the kernel does x @ W_T + b.
    wq_t = params["wq"].T
    wk_t = params["wk"].T
    wv_t = params["wv"].T
    wo_t = params["wo"].T
    bq = params["bq"].reshape(1, D)
    bk = params["bk"].reshape(1, D)
    bv = params["bv"].reshape(1, D)
    bo = params["bo"].reshape(1, D)

    kernel = functools.partial(_mha_kernel, num_heads, d_k, 1.0 / math.sqrt(d_k))

    weight2d = pl.BlockSpec((D, D), lambda b, t: (0, 0))    # resident across grid
    bias2d = pl.BlockSpec((1, D), lambda b, t: (0, 0))
    q_spec = pl.BlockSpec((1, tq, D), lambda b, t: (b, t, 0))
    kv_spec = pl.BlockSpec((1, S, D), lambda b, t: (b, 0, 0))

    out, attn = pl.pallas_call(
        kernel,
        grid=(B, S // tq),
        in_specs=[q_spec, kv_spec, kv_spec,
                  weight2d, bias2d, weight2d, bias2d,
                  weight2d, bias2d, weight2d, bias2d],
        out_specs=[
            pl.BlockSpec((1, tq, D), lambda b, t: (b, t, 0)),
            pl.BlockSpec((1, num_heads, tq, S), lambda b, t: (b, 0, t, 0)),
        ],
        out_shape=[
            jax.ShapeDtypeStruct((B, S, D), jnp.float32),
            jax.ShapeDtypeStruct((B, num_heads, S, S), jnp.float32),
        ],
        compiler_params=pltpu.CompilerParams(
            dimension_semantics=("parallel", "parallel"),
            vmem_limit_bytes=48 * 1024 * 1024,
        ),
    )(query, key, value, wq_t, bq, wk_t, bk, wv_t, bv, wo_t, bo)
    return out, attn


def _reference(query, key, value, params, num_heads):
    B, S, D = query.shape
    d_k = D // num_heads

    def lin(x, w, b):
        return x @ w.T + b

    q = lin(query, params["wq"], params["bq"]).reshape(B, S, num_heads, d_k).transpose(0, 2, 1, 3)
    k = lin(key, params["wk"], params["bk"]).reshape(B, S, num_heads, d_k).transpose(0, 2, 1, 3)
    v = lin(value, params["wv"], params["bv"]).reshape(B, S, num_heads, d_k).transpose(0, 2, 1, 3)
    scores = jnp.einsum("bhqd,bhkd->bhqk", q, k) / math.sqrt(d_k)
    attn = jax.nn.softmax(scores, axis=-1)
    ctx = jnp.einsum("bhqk,bhkd->bhqd", attn, v).transpose(0, 2, 1, 3).reshape(B, S, D)
    out = lin(ctx, params["wo"], params["bo"])
    return out, attn


if __name__ == "__main__":
    B, S, D, H = 2, 8, 32, 4
    key0 = jax.random.PRNGKey(0)
    ks = jax.random.split(key0, 12)

    bound = 1.0 / math.sqrt(D)
    params = {
        "wq": jax.random.uniform(ks[0], (D, D), jnp.float32, -bound, bound),
        "bq": jax.random.uniform(ks[1], (D,), jnp.float32, -bound, bound),
        "wk": jax.random.uniform(ks[2], (D, D), jnp.float32, -bound, bound),
        "bk": jax.random.uniform(ks[3], (D,), jnp.float32, -bound, bound),
        "wv": jax.random.uniform(ks[4], (D, D), jnp.float32, -bound, bound),
        "bv": jax.random.uniform(ks[5], (D,), jnp.float32, -bound, bound),
        "wo": jax.random.uniform(ks[6], (D, D), jnp.float32, -bound, bound),
        "bo": jax.random.uniform(ks[7], (D,), jnp.float32, -bound, bound),
    }

    query = jax.random.normal(ks[8], (B, S, D), jnp.float32)
    key_in = jax.random.normal(ks[9], (B, S, D), jnp.float32)
    value = jax.random.normal(ks[10], (B, S, D), jnp.float32)

    out, attn = multi_head_attention(query, key_in, value, params, H)
    jax.block_until_ready(out)
    jax.block_until_ready(attn)

    out_ref, attn_ref = _reference(query, key_in, value, params, H)
    assert out.shape == (B, S, D) and attn.shape == (B, H, S, S)
    # Tolerance is relaxed slightly because the softmax denominator uses the
    # EUP approximate reciprocal (pl.reciprocal(..., approx=True)).
    assert jnp.allclose(out, out_ref, atol=1e-2, rtol=1e-2)
    assert jnp.allclose(attn, attn_ref, atol=1e-2, rtol=1e-2)

    print("KERNEL_OK")
</pallas_src>

<mosaic_0001>
module attributes {stable_mosaic.version = 11 : i64} {
  func.func @_mha_kernel(%arg0: i32, %arg1: i32, %arg2: memref<1x8x32xf32, #tpu.memory_space<vmem>>, %arg3: memref<1x8x32xf32, #tpu.memory_space<vmem>>, %arg4: memref<1x8x32xf32, #tpu.memory_space<vmem>>, %arg5: memref<32x32xf32, #tpu.memory_space<vmem>>, %arg6: memref<1x32xf32, #tpu.memory_space<vmem>>, %arg7: memref<32x32xf32, #tpu.memory_space<vmem>>, %arg8: memref<1x32xf32, #tpu.memory_space<vmem>>, %arg9: memref<32x32xf32, #tpu.memory_space<vmem>>, %arg10: memref<1x32xf32, #tpu.memory_space<vmem>>, %arg11: memref<32x32xf32, #tpu.memory_space<vmem>>, %arg12: memref<1x32xf32, #tpu.memory_space<vmem>>, %arg13: memref<1x8x32xf32, #tpu.memory_space<vmem>>, %arg14: memref<1x4x8x8xf32, #tpu.memory_space<vmem>>) attributes {dimension_semantics = [#tpu.dimension_semantics<parallel>, #tpu.dimension_semantics<parallel>], iteration_bounds = array<i64: 2, 1>, scalar_prefetch = 0 : i64, scratch_operands = 0 : i64, tpu.core_type = #tpu.core_type<tc>, window_params = [{transform_indices = @transform_0, window_bounds = array<i64: 1, 8, 32>}, {transform_indices = @transform_1, window_bounds = array<i64: 1, 8, 32>}, {transform_indices = @transform_2, window_bounds = array<i64: 1, 8, 32>}, {pipeline_mode = #tpu.pipeline_mode<synchronous>, transform_indices = @transform_3, window_bounds = array<i64: 32, 32>}, {pipeline_mode = #tpu.pipeline_mode<synchronous>, transform_indices = @transform_4, window_bounds = array<i64: 1, 32>}, {pipeline_mode = #tpu.pipeline_mode<synchronous>, transform_indices = @transform_5, window_bounds = array<i64: 32, 32>}, {pipeline_mode = #tpu.pipeline_mode<synchronous>, transform_indices = @transform_6, window_bounds = array<i64: 1, 32>}, {pipeline_mode = #tpu.pipeline_mode<synchronous>, transform_indices = @transform_7, window_bounds = array<i64: 32, 32>}, {pipeline_mode = #tpu.pipeline_mode<synchronous>, transform_indices = @transform_8, window_bounds = array<i64: 1, 32>}, {pipeline_mode = #tpu.pipeline_mode<synchronous>, transform_indices = @transform_9, window_bounds = array<i64: 32, 32>}, {pipeline_mode = #tpu.pipeline_mode<synchronous>, transform_indices = @transform_10, window_bounds = array<i64: 1, 32>}, {transform_indices = @transform_11, window_bounds = array<i64: 1, 8, 32>}, {transform_indices = @transform_12, window_bounds = array<i64: 1, 4, 8, 8>}]} {
    %c0 = arith.constant 0 : index
    %c0_0 = arith.constant 0 : index
    %c0_1 = arith.constant 0 : index
    %0 = vector.load %arg2[%c0, %c0_0, %c0_1] : memref<1x8x32xf32, #tpu.memory_space<vmem>>, vector<1x8x32xf32>
    %1 = vector.shape_cast %0 : vector<1x8x32xf32> to vector<8x32xf32>
    %c0_2 = arith.constant 0 : index
    %c0_3 = arith.constant 0 : index
    %c0_4 = arith.constant 0 : index
    %2 = vector.load %arg3[%c0_2, %c0_3, %c0_4] : memref<1x8x32xf32, #tpu.memory_space<vmem>>, vector<1x8x32xf32>
    %3 = vector.shape_cast %2 : vector<1x8x32xf32> to vector<8x32xf32>
    %c0_5 = arith.constant 0 : index
    %c0_6 = arith.constant 0 : index
    %c0_7 = arith.constant 0 : index
    %4 = vector.load %arg4[%c0_5, %c0_6, %c0_7] : memref<1x8x32xf32, #tpu.memory_space<vmem>>, vector<1x8x32xf32>
    %5 = vector.shape_cast %4 : vector<1x8x32xf32> to vector<8x32xf32>
    %c0_8 = arith.constant 0 : index
    %c0_9 = arith.constant 0 : index
    %6 = vector.load %arg5[%c0_8, %c0_9] : memref<32x32xf32, #tpu.memory_space<vmem>>, vector<32x32xf32>
    %cst = arith.constant dense<0.000000e+00> : vector<8x32xf32>
    %7 = tpu.matmul %1, %6, %cst {dimension_numbers = #tpu.dot_dimension_numbers<[1], [0], [0], [1], [0, 0, 1, 1], [], []>} : vector<8x32xf32>, vector<32x32xf32>, vector<8x32xf32> -> vector<8x32xf32>
    %c0_10 = arith.constant 0 : index
    %c0_11 = arith.constant 0 : index
    %8 = vector.load %arg6[%c0_10, %c0_11] : memref<1x32xf32, #tpu.memory_space<vmem>>, vector<1x32xf32>
    %9 = vector.broadcast %8 : vector<1x32xf32> to vector<8x32xf32>
    %10 = arith.addf %7, %9 : vector<8x32xf32>
    %cst_12 = arith.constant 0.353553385 : f32
    %11 = vector.broadcast %cst_12 : f32 to vector<8x32xf32>
    %12 = arith.mulf %10, %11 : vector<8x32xf32>
    %c0_13 = arith.constant 0 : index
    %c0_14 = arith.constant 0 : index
    %13 = vector.load %arg7[%c0_13, %c0_14] : memref<32x32xf32, #tpu.memory_space<vmem>>, vector<32x32xf32>
    %cst_15 = arith.constant dense<0.000000e+00> : vector<8x32xf32>
    %14 = tpu.matmul %3, %13, %cst_15 {dimension_numbers = #tpu.dot_dimension_numbers<[1], [0], [0], [1], [0, 0, 1, 1], [], []>} : vector<8x32xf32>, vector<32x32xf32>, vector<8x32xf32> -> vector<8x32xf32>
    %c0_16 = arith.constant 0 : index
    %c0_17 = arith.constant 0 : index
    %15 = vector.load %arg8[%c0_16, %c0_17] : memref<1x32xf32, #tpu.memory_space<vmem>>, vector<1x32xf32>
    %16 = vector.broadcast %15 : vector<1x32xf32> to vector<8x32xf32>
    %17 = arith.addf %14, %16 : vector<8x32xf32>
    %c0_18 = arith.constant 0 : index
    %c0_19 = arith.constant 0 : index
    %18 = vector.load %arg9[%c0_18, %c0_19] : memref<32x32xf32, #tpu.memory_space<vmem>>, vector<32x32xf32>
    %cst_20 = arith.constant dense<0.000000e+00> : vector<8x32xf32>
    %19 = tpu.matmul %5, %18, %cst_20 {dimension_numbers = #tpu.dot_dimension_numbers<[1], [0], [0], [1], [0, 0, 1, 1], [], []>} : vector<8x32xf32>, vector<32x32xf32>, vector<8x32xf32> -> vector<8x32xf32>
    %c0_21 = arith.constant 0 : index
    %c0_22 = arith.constant 0 : index
    %20 = vector.load %arg10[%c0_21, %c0_22] : memref<1x32xf32, #tpu.memory_space<vmem>>, vector<1x32xf32>
    %21 = vector.broadcast %20 : vector<1x32xf32> to vector<8x32xf32>
    %22 = arith.addf %19, %21 : vector<8x32xf32>
    %23 = vector.extract_strided_slice %12 {offsets = [0, 0], sizes = [8, 8], strides = [1, 1]} : vector<8x32xf32> to vector<8x8xf32>
    %24 = vector.extract_strided_slice %17 {offsets = [0, 0], sizes = [8, 8], strides = [1, 1]} : vector<8x32xf32> to vector<8x8xf32>
    %25 = vector.extract_strided_slice %22 {offsets = [0, 0], sizes = [8, 8], strides = [1, 1]} : vector<8x32xf32> to vector<8x8xf32>
    %cst_23 = arith.constant dense<0.000000e+00> : vector<8x8xf32>
    %26 = tpu.matmul %23, %24, %cst_23 {dimension_numbers = #tpu.dot_dimension_numbers<[1], [1], [0], [0], [0, 0, 1, 0], [], []>} : vector<8x8xf32>, vector<8x8xf32>, vector<8x8xf32> -> vector<8x8xf32>
    %cst_24 = arith.constant dense<0xFF800000> : vector<8xf32>
    %27 = vector.multi_reduction <maximumf>, %26, %cst_24 [1] : vector<8x8xf32> to vector<8xf32>
    %28 = vector.shape_cast %27 : vector<8xf32> to vector<8x1xf32>
    %29 = vector.broadcast %28 : vector<8x1xf32> to vector<8x8xf32>
    %30 = arith.subf %26, %29 : vector<8x8xf32>
    %31 = math.exp %30 : vector<8x8xf32>
    %cst_25 = arith.constant dense<0.000000e+00> : vector<8xf32>
    %32 = vector.multi_reduction <add>, %31, %cst_25 [1] : vector<8x8xf32> to vector<8xf32>
    %33 = vector.shape_cast %32 : vector<8xf32> to vector<8x1xf32>
    %34 = tpu.reciprocal %33 {approx = true} : vector<8x1xf32> -> vector<8x1xf32>
    %35 = vector.broadcast %34 : vector<8x1xf32> to vector<8x8xf32>
    %36 = arith.mulf %31, %35 : vector<8x8xf32>
    %c0_26 = arith.constant 0 : index
    %c0_27 = arith.constant 0 : index
    %c0_28 = arith.constant 0 : index
    %c0_29 = arith.constant 0 : index
    %37 = vector.load %arg14[%c0_26, %c0_27, %c0_28, %c0_29] : memref<1x4x8x8xf32, #tpu.memory_space<vmem>>, vector<1x1x8x8xf32>
    %38 = vector.shape_cast %37 : vector<1x1x8x8xf32> to vector<8x8xf32>
    %39 = vector.shape_cast %36 : vector<8x8xf32> to vector<1x1x8x8xf32>
    tpu.vector_store %arg14[%c0_26, %c0_27, %c0_28, %c0_29], %39 {strides = array<i32>} : memref<1x4x8x8xf32, #tpu.memory_space<vmem>>, vector<1x1x8x8xf32>,
    %cst_30 = arith.constant dense<0.000000e+00> : vector<8x8xf32>
    %40 = tpu.matmul %36, %25, %cst_30 {dimension_numbers = #tpu.dot_dimension_numbers<[1], [0], [0], [1], [0, 0, 1, 1], [], []>} : vector<8x8xf32>, vector<8x8xf32>, vector<8x8xf32> -> vector<8x8xf32>
    %c0_31 = arith.constant 0 : index
    %c0_32 = arith.constant 0 : index
    %41 = vector.load %arg11[%c0_31, %c0_32] : memref<32x32xf32, #tpu.memory_space<vmem>>, vector<8x32xf32>
    %cst_33 = arith.constant dense<0.000000e+00> : vector<8x32xf32>
    %42 = tpu.matmul %40, %41, %cst_33 {dimension_numbers = #tpu.dot_dimension_numbers<[1], [0], [0], [1], [0, 0, 1, 1], [], []>} : vector<8x8xf32>, vector<8x32xf32>, vector<8x32xf32> -> vector<8x32xf32>
    %43 = vector.extract_strided_slice %12 {offsets = [0, 8], sizes = [8, 8], strides = [1, 1]} : vector<8x32xf32> to vector<8x8xf32>
    %44 = vector.extract_strided_slice %17 {offsets = [0, 8], sizes = [8, 8], strides = [1, 1]} : vector<8x32xf32> to vector<8x8xf32>
    %45 = vector.extract_strided_slice %22 {offsets = [0, 8], sizes = [8, 8], strides = [1, 1]} : vector<8x32xf32> to vector<8x8xf32>
    %cst_34 = arith.constant dense<0.000000e+00> : vector<8x8xf32>
    %46 = tpu.matmul %43, %44, %cst_34 {dimension_numbers = #tpu.dot_dimension_numbers<[1], [1], [0], [0], [0, 0, 1, 0], [], []>} : vector<8x8xf32>, vector<8x8xf32>, vector<8x8xf32> -> vector<8x8xf32>
    %cst_35 = arith.constant dense<0xFF800000> : vector<8xf32>
    %47 = vector.multi_reduction <maximumf>, %46, %cst_35 [1] : vector<8x8xf32> to vector<8xf32>
    %48 = vector.shape_cast %47 : vector<8xf32> to vector<8x1xf32>
    %49 = vector.broadcast %48 : vector<8x1xf32> to vector<8x8xf32>
    %50 = arith.subf %46, %49 : vector<8x8xf32>
    %51 = math.exp %50 : vector<8x8xf32>
    %cst_36 = arith.constant dense<0.000000e+00> : vector<8xf32>
    %52 = vector.multi_reduction <add>, %51, %cst_36 [1] : vector<8x8xf32> to vector<8xf32>
    %53 = vector.shape_cast %52 : vector<8xf32> to vector<8x1xf32>
    %54 = tpu.reciprocal %53 {approx = true} : vector<8x1xf32> -> vector<8x1xf32>
    %55 = vector.broadcast %54 : vector<8x1xf32> to vector<8x8xf32>
    %56 = arith.mulf %51, %55 : vector<8x8xf32>
    %c0_37 = arith.constant 0 : index
    %c1 = arith.constant 1 : index
    %c0_38 = arith.constant 0 : index
    %c0_39 = arith.constant 0 : index
    %57 = vector.load %arg14[%c0_37, %c1, %c0_38, %c0_39] : memref<1x4x8x8xf32, #tpu.memory_space<vmem>>, vector<1x1x8x8xf32>
    %58 = vector.shape_cast %57 : vector<1x1x8x8xf32> to vector<8x8xf32>
    %59 = vector.shape_cast %56 : vector<8x8xf32> to vector<1x1x8x8xf32>
    tpu.vector_store %arg14[%c0_37, %c1, %c0_38, %c0_39], %59 {strides = array<i32>} : memref<1x4x8x8xf32, #tpu.memory_space<vmem>>, vector<1x1x8x8xf32>,
    %cst_40 = arith.constant dense<0.000000e+00> : vector<8x8xf32>
    %60 = tpu.matmul %56, %45, %cst_40 {dimension_numbers = #tpu.dot_dimension_numbers<[1], [0], [0], [1], [0, 0, 1, 1], [], []>} : vector<8x8xf32>, vector<8x8xf32>, vector<8x8xf32> -> vector<8x8xf32>
    %c8 = arith.constant 8 : index
    %c0_41 = arith.constant 0 : index
    %61 = vector.load %arg11[%c8, %c0_41] : memref<32x32xf32, #tpu.memory_space<vmem>>, vector<8x32xf32>
    %cst_42 = arith.constant dense<0.000000e+00> : vector<8x32xf32>
    %62 = tpu.matmul %60, %61, %cst_42 {dimension_numbers = #tpu.dot_dimension_numbers<[1], [0], [0], [1], [0, 0, 1, 1], [], []>} : vector<8x8xf32>, vector<8x32xf32>, vector<8x32xf32> -> vector<8x32xf32>
    %63 = arith.addf %42, %62 : vector<8x32xf32>
    %64 = vector.extract_strided_slice %12 {offsets = [0, 16], sizes = [8, 8], strides = [1, 1]} : vector<8x32xf32> to vector<8x8xf32>
    %65 = vector.extract_strided_slice %17 {offsets = [0, 16], sizes = [8, 8], strides = [1, 1]} : vector<8x32xf32> to vector<8x8xf32>
    %66 = vector.extract_strided_slice %22 {offsets = [0, 16], sizes = [8, 8], strides = [1, 1]} : vector<8x32xf32> to vector<8x8xf32>
    %cst_43 = arith.constant dense<0.000000e+00> : vector<8x8xf32>
    %67 = tpu.matmul %64, %65, %cst_43 {dimension_numbers = #tpu.dot_dimension_numbers<[1], [1], [0], [0], [0, 0, 1, 0], [], []>} : vector<8x8xf32>, vector<8x8xf32>, vector<8x8xf32> -> vector<8x8xf32>
    %cst_44 = arith.constant dense<0xFF800000> : vector<8xf32>
    %68 = vector.multi_reduction <maximumf>, %67, %cst_44 [1] : vector<8x8xf32> to vector<8xf32>
    %69 = vector.shape_cast %68 : vector<8xf32> to vector<8x1xf32>
    %70 = vector.broadcast %69 : vector<8x1xf32> to vector<8x8xf32>
    %71 = arith.subf %67, %70 : vector<8x8xf32>
    %72 = math.exp %71 : vector<8x8xf32>
    %cst_45 = arith.constant dense<0.000000e+00> : vector<8xf32>
    %73 = vector.multi_reduction <add>, %72, %cst_45 [1] : vector<8x8xf32> to vector<8xf32>
    %74 = vector.shape_cast %73 : vector<8xf32> to vector<8x1xf32>
    %75 = tpu.reciprocal %74 {approx = true} : vector<8x1xf32> -> vector<8x1xf32>
    %76 = vector.broadcast %75 : vector<8x1xf32> to vector<8x8xf32>
    %77 = arith.mulf %72, %76 : vector<8x8xf32>
    %c0_46 = arith.constant 0 : index
    %c2 = arith.constant 2 : index
    %c0_47 = arith.constant 0 : index
    %c0_48 = arith.constant 0 : index
    %78 = vector.load %arg14[%c0_46, %c2, %c0_47, %c0_48] : memref<1x4x8x8xf32, #tpu.memory_space<vmem>>, vector<1x1x8x8xf32>
    %79 = vector.shape_cast %78 : vector<1x1x8x8xf32> to vector<8x8xf32>
    %80 = vector.shape_cast %77 : vector<8x8xf32> to vector<1x1x8x8xf32>
    tpu.vector_store %arg14[%c0_46, %c2, %c0_47, %c0_48], %80 {strides = array<i32>} : memref<1x4x8x8xf32, #tpu.memory_space<vmem>>, vector<1x1x8x8xf32>,
    %cst_49 = arith.constant dense<0.000000e+00> : vector<8x8xf32>
    %81 = tpu.matmul %77, %66, %cst_49 {dimension_numbers = #tpu.dot_dimension_numbers<[1], [0], [0], [1], [0, 0, 1, 1], [], []>} : vector<8x8xf32>, vector<8x8xf32>, vector<8x8xf32> -> vector<8x8xf32>
    %c16 = arith.constant 16 : index
    %c0_50 = arith.constant 0 : index
    %82 = vector.load %arg11[%c16, %c0_50] : memref<32x32xf32, #tpu.memory_space<vmem>>, vector<8x32xf32>
    %cst_51 = arith.constant dense<0.000000e+00> : vector<8x32xf32>
    %83 = tpu.matmul %81, %82, %cst_51 {dimension_numbers = #tpu.dot_dimension_numbers<[1], [0], [0], [1], [0, 0, 1, 1], [], []>} : vector<8x8xf32>, vector<8x32xf32>, vector<8x32xf32> -> vector<8x32xf32>
    %84 = arith.addf %63, %83 : vector<8x32xf32>
    %85 = vector.extract_strided_slice %12 {offsets = [0, 24], sizes = [8, 8], strides = [1, 1]} : vector<8x32xf32> to vector<8x8xf32>
    %86 = vector.extract_strided_slice %17 {offsets = [0, 24], sizes = [8, 8], strides = [1, 1]} : vector<8x32xf32> to vector<8x8xf32>
    %87 = vector.extract_strided_slice %22 {offsets = [0, 24], sizes = [8, 8], strides = [1, 1]} : vector<8x32xf32> to vector<8x8xf32>
    %cst_52 = arith.constant dense<0.000000e+00> : vector<8x8xf32>
    %88 = tpu.matmul %85, %86, %cst_52 {dimension_numbers = #tpu.dot_dimension_numbers<[1], [1], [0], [0], [0, 0, 1, 0], [], []>} : vector<8x8xf32>, vector<8x8xf32>, vector<8x8xf32> -> vector<8x8xf32>
    %cst_53 = arith.constant dense<0xFF800000> : vector<8xf32>
    %89 = vector.multi_reduction <maximumf>, %88, %cst_53 [1] : vector<8x8xf32> to vector<8xf32>
    %90 = vector.shape_cast %89 : vector<8xf32> to vector<8x1xf32>
    %91 = vector.broadcast %90 : vector<8x1xf32> to vector<8x8xf32>
    %92 = arith.subf %88, %91 : vector<8x8xf32>
    %93 = math.exp %92 : vector<8x8xf32>
    %cst_54 = arith.constant dense<0.000000e+00> : vector<8xf32>
    %94 = vector.multi_reduction <add>, %93, %cst_54 [1] : vector<8x8xf32> to vector<8xf32>
    %95 = vector.shape_cast %94 : vector<8xf32> to vector<8x1xf32>
    %96 = tpu.reciprocal %95 {approx = true} : vector<8x1xf32> -> vector<8x1xf32>
    %97 = vector.broadcast %96 : vector<8x1xf32> to vector<8x8xf32>
    %98 = arith.mulf %93, %97 : vector<8x8xf32>
    %c0_55 = arith.constant 0 : index
    %c3 = arith.constant 3 : index
    %c0_56 = arith.constant 0 : index
    %c0_57 = arith.constant 0 : index
    %99 = vector.load %arg14[%c0_55, %c3, %c0_56, %c0_57] : memref<1x4x8x8xf32, #tpu.memory_space<vmem>>, vector<1x1x8x8xf32>
    %100 = vector.shape_cast %99 : vector<1x1x8x8xf32> to vector<8x8xf32>
    %101 = vector.shape_cast %98 : vector<8x8xf32> to vector<1x1x8x8xf32>
    tpu.vector_store %arg14[%c0_55, %c3, %c0_56, %c0_57], %101 {strides = array<i32>} : memref<1x4x8x8xf32, #tpu.memory_space<vmem>>, vector<1x1x8x8xf32>,
    %cst_58 = arith.constant dense<0.000000e+00> : vector<8x8xf32>
    %102 = tpu.matmul %98, %87, %cst_58 {dimension_numbers = #tpu.dot_dimension_numbers<[1], [0], [0], [1], [0, 0, 1, 1], [], []>} : vector<8x8xf32>, vector<8x8xf32>, vector<8x8xf32> -> vector<8x8xf32>
    %c24 = arith.constant 24 : index
    %c0_59 = arith.constant 0 : index
    %103 = vector.load %arg11[%c24, %c0_59] : memref<32x32xf32, #tpu.memory_space<vmem>>, vector<8x32xf32>
    %cst_60 = arith.constant dense<0.000000e+00> : vector<8x32xf32>
    %104 = tpu.matmul %102, %103, %cst_60 {dimension_numbers = #tpu.dot_dimension_numbers<[1], [0], [0], [1], [0, 0, 1, 1], [], []>} : vector<8x8xf32>, vector<8x32xf32>, vector<8x32xf32> -> vector<8x32xf32>
    %105 = arith.addf %84, %104 : vector<8x32xf32>
    %c0_61 = arith.constant 0 : index
    %c0_62 = arith.constant 0 : index
    %106 = vector.load %arg12[%c0_61, %c0_62] : memref<1x32xf32, #tpu.memory_space<vmem>>, vector<1x32xf32>
    %107 = vector.broadcast %106 : vector<1x32xf32> to vector<8x32xf32>
    %108 = arith.addf %105, %107 : vector<8x32xf32>
    %c0_63 = arith.constant 0 : index
    %c0_64 = arith.constant 0 : index
    %c0_65 = arith.constant 0 : index
    %109 = vector.load %arg13[%c0_63, %c0_64, %c0_65] : memref<1x8x32xf32, #tpu.memory_space<vmem>>, vector<1x8x32xf32>
    %110 = vector.shape_cast %109 : vector<1x8x32xf32> to vector<8x32xf32>
    %111 = vector.shape_cast %108 : vector<8x32xf32> to vector<1x8x32xf32>
    tpu.vector_store %arg13[%c0_63, %c0_64, %c0_65], %111 {strides = array<i32>} : memref<1x8x32xf32, #tpu.memory_space<vmem>>, vector<1x8x32xf32>,
    return
  }
  func.func @transform_0(%arg0: i32, %arg1: i32) -> (i32, i32, i32) {
    %c0_i32 = arith.constant 0 : i32
    %c0_i32_0 = arith.constant 0 : i32
    return %arg0, %arg1, %c0_i32 : i32, i32, i32
  }
  func.func @transform_1(%arg0: i32, %arg1: i32) -> (i32, i32, i32) {
    %c0_i32 = arith.constant 0 : i32
    %c0_i32_0 = arith.constant 0 : i32
    %c0_i32_1 = arith.constant 0 : i32
    return %arg0, %c0_i32, %c0_i32_0 : i32, i32, i32
  }
  func.func @transform_2(%arg0: i32, %arg1: i32) -> (i32, i32, i32) {
    %c0_i32 = arith.constant 0 : i32
    %c0_i32_0 = arith.constant 0 : i32
    %c0_i32_1 = arith.constant 0 : i32
    return %arg0, %c0_i32, %c0_i32_0 : i32, i32, i32
  }
  func.func @transform_3(%arg0: i32, %arg1: i32) -> (i32, i32) {
    %c0_i32 = arith.constant 0 : i32
    %c0_i32_0 = arith.constant 0 : i32
    %c0_i32_1 = arith.constant 0 : i32
    return %c0_i32, %c0_i32_0 : i32, i32
  }
  func.func @transform_4(%arg0: i32, %arg1: i32) -> (i32, i32) {
    %c0_i32 = arith.constant 0 : i32
    %c0_i32_0 = arith.constant 0 : i32
    %c0_i32_1 = arith.constant 0 : i32
    return %c0_i32, %c0_i32_0 : i32, i32
  }
  func.func @transform_5(%arg0: i32, %arg1: i32) -> (i32, i32) {
    %c0_i32 = arith.constant 0 : i32
    %c0_i32_0 = arith.constant 0 : i32
    %c0_i32_1 = arith.constant 0 : i32
    return %c0_i32, %c0_i32_0 : i32, i32
  }
  func.func @transform_6(%arg0: i32, %arg1: i32) -> (i32, i32) {
    %c0_i32 = arith.constant 0 : i32
    %c0_i32_0 = arith.constant 0 : i32
    %c0_i32_1 = arith.constant 0 : i32
    return %c0_i32, %c0_i32_0 : i32, i32
  }
  func.func @transform_7(%arg0: i32, %arg1: i32) -> (i32, i32) {
    %c0_i32 = arith.constant 0 : i32
    %c0_i32_0 = arith.constant 0 : i32
    %c0_i32_1 = arith.constant 0 : i32
    return %c0_i32, %c0_i32_0 : i32, i32
  }
  func.func @transform_8(%arg0: i32, %arg1: i32) -> (i32, i32) {
    %c0_i32 = arith.constant 0 : i32
    %c0_i32_0 = arith.constant 0 : i32
    %c0_i32_1 = arith.constant 0 : i32
    return %c0_i32, %c0_i32_0 : i32, i32
  }
  func.func @transform_9(%arg0: i32, %arg1: i32) -> (i32, i32) {
    %c0_i32 = arith.constant 0 : i32
    %c0_i32_0 = arith.constant 0 : i32
    %c0_i32_1 = arith.constant 0 : i32
    return %c0_i32, %c0_i32_0 : i32, i32
  }
  func.func @transform_10(%arg0: i32, %arg1: i32) -> (i32, i32) {
    %c0_i32 = arith.constant 0 : i32
    %c0_i32_0 = arith.constant 0 : i32
    %c0_i32_1 = arith.constant 0 : i32
    return %c0_i32, %c0_i32_0 : i32, i32
  }
  func.func @transform_11(%arg0: i32, %arg1: i32) -> (i32, i32, i32) {
    %c0_i32 = arith.constant 0 : i32
    %c0_i32_0 = arith.constant 0 : i32
    return %arg0, %arg1, %c0_i32 : i32, i32, i32
  }
  func.func @transform_12(%arg0: i32, %arg1: i32) -> (i32, i32, i32, i32) {
    %c0_i32 = arith.constant 0 : i32
    %c0_i32_0 = arith.constant 0 : i32
    %c0_i32_1 = arith.constant 0 : i32
    return %arg0, %c0_i32, %arg1, %c0_i32_0 : i32, i32, i32, i32
  }
}

</mosaic_0001>

<llo_original>
// kernel: tpu_custom_call.1
$region0: #{tpu_custom_call.1}
  #allocation0 [shape = 'u32[]', space=smem, size = 0x4, offset = 0x4, fixed_abs, tag = 'smem constant byte address 0x4 - core index']
  #allocation1 [shape = 'u32[144,128]{1,0:T(1,128)}', space=vmem, size = 0x12000, scoped, tag = 'internal scratch']
  %s0 = inlined_call_operand.hbm [shape: f32[2,8,32], index: 0, kind: input, shape index: {}]
  %s1 = inlined_call_operand.hbm [shape: f32[2,8,32], index: 1, kind: input, shape index: {}]
  %s2 = inlined_call_operand.hbm [shape: f32[2,8,32], index: 2, kind: input, shape index: {}]
  %s3 = inlined_call_operand.hbm [shape: f32[32,32], index: 3, kind: input, shape index: {}]
  %s4 = inlined_call_operand.vmem [shape: f32[1,32], index: 4, kind: input, shape index: {}]
  %s5 = inlined_call_operand.hbm [shape: f32[32,32], index: 5, kind: input, shape index: {}]
  %s6 = inlined_call_operand.vmem [shape: f32[1,32], index: 6, kind: input, shape index: {}]
  %s7 = inlined_call_operand.hbm [shape: f32[32,32], index: 7, kind: input, shape index: {}]
  %s8 = inlined_call_operand.vmem [shape: f32[1,32], index: 8, kind: input, shape index: {}]
  %s9 = inlined_call_operand.hbm [shape: f32[32,32], index: 9, kind: input, shape index: {}]
  %s10 = inlined_call_operand.vmem [shape: f32[1,32], index: 10, kind: input, shape index: {}]
  %s11 = inlined_call_operand.hbm [shape: f32[2,8,32], index: 11, kind: output, shape index: {0}]
  %s12 = inlined_call_operand.hbm [shape: f32[2,4,8,8], index: 12, kind: output, shape index: {1}]
  %13 = xla_tuple %s11, %s12
  %s14 = sld [smem:[#allocation0]]
  $region113: #{tpu_custom_call.1} parent=0
    _
  %s16 = ssub.s32 1, %s14
  %s17 = scalar_select 0, %s16, %s14
  $region1: #{tpu_custom_call.1} parent=0
    #allocation2 [shape = 'u8[8192]{0}', space=vmem, size = 0x2000, scoped, tag = 'input window, operand 0']
    #allocation3 [shape = 's32[2]{0}', space=sflag, size = 0x8, scoped, tag = 'scoped memory for tpu_custom_call.1']
    #allocation4 [shape = 's32[2]{0}', space=sflag, size = 0x8, scoped, tag = 'scoped memory for tpu_custom_call.1']
    #allocation5 [shape = 'u8[8192]{0}', space=vmem, size = 0x2000, scoped, tag = 'input window, operand 1']
    #allocation6 [shape = 's32[2]{0}', space=sflag, size = 0x8, scoped, tag = 'scoped memory for tpu_custom_call.1']
    #allocation7 [shape = 'u8[8192]{0}', space=vmem, size = 0x2000, scoped, tag = 'input window, operand 2']
    #allocation8 [shape = 'u8[16384]{0}', space=vmem, size = 0x4000, scoped, tag = 'input window, operand 3, single buffered']
    #allocation9 [shape = 's32[1]{0}', space=sflag, size = 0x4, scoped, tag = 'scoped memory for tpu_custom_call.1']
    #allocation10 [shape = 'u8[16384]{0}', space=vmem, size = 0x4000, scoped, tag = 'input window, operand 5, single buffered']
    #allocation11 [shape = 'u8[16384]{0}', space=vmem, size = 0x4000, scoped, tag = 'input window, operand 7, single buffered']
    #allocation12 [shape = 's32[1]{0}', space=sflag, size = 0x4, scoped, tag = 'scoped memory for tpu_custom_call.1']
    #allocation13 [shape = 'u8[16384]{0}', space=vmem, size = 0x4000, scoped, tag = 'input window, operand 9, single buffered']
    #allocation14 [shape = 'u8[8192]{0}', space=vmem, size = 0x2000, scoped, tag = 'output window, operand 0']
    #allocation15 [shape = 'u8[32768]{0}', space=vmem, size = 0x8000, scoped, tag = 'output window, operand 1']
    #allocation16 [shape = 's32[2]{0}', space=sflag, size = 0x8, scoped, tag = 'scoped memory for tpu_custom_call.1']
    %18 = vsyncpa [#allocation3], 0
    %s19 = scalar_lea.sflag [#allocation3], 1
    %20 = vsyncpa %s19, 0
    %21 = vsyncpa [#allocation6], 0
    %s22 = scalar_lea.sflag [#allocation6], 1
    %23 = vsyncpa %s22, 0
    %24 = vsyncpa [#allocation9], 0
    %25 = vsyncpa [#allocation12], 0
    %26 = vsyncpa [#allocation4], 0
    %s27 = scalar_lea.sflag [#allocation4], 1
    %28 = vsyncpa %s27, 0
    %29 = vsyncpa [#allocation16], 0
    %s30 = scalar_lea.sflag [#allocation16], 1
    %31 = vsyncpa %s30, 0
    loop: start=0, step=1, limit=4
    $region2: #{tpu_custom_call.1} parent=1 // loop_pre_header
      _
    $region3: #{tpu_custom_call.1} parent=1 // loop_header
      %s33 = sphi 0, %s37
      %p34 = scmp.ge.s32.totalorder %s33, 4
      %s40 = sphi 0, %s52
      %s41 = sphi 0, %s48
      %s42 = sphi 0, %s40
      %s43 = sphi 0, %s41
      %s44 = sphi 0, %s42
      %s45 = sphi 0, %s43
      %s57 = sphi 0, %s59
      %s60 = sphi 0, %s57
      %s61 = sphi 0, %s60
      %s77 = sphi 0, %s61
      %s83 = sphi 0, %s85
      %s86 = sphi 0, %s83
      %s87 = sphi 0, %s86
      %s103 = sphi 0, %s87
      %s109 = sphi 0, %s111
      %s112 = sphi 0, %s109
      %s113 = sphi 0, %s112
      %s129 = sphi 0, %s113
      %s133 = sphi 0, %s133
      %s135 = sphi 0, %s133
      %s136 = sphi 0, %s135
      %s150 = sphi 0, %s136
      %s154 = sphi 0, %s154
      %s156 = sphi 0, %s154
      %s157 = sphi 0, %s156
      %s171 = sphi 0, %s157
      %s175 = sphi 0, %s175
      %s177 = sphi 0, %s175
      %s178 = sphi 0, %s177
      %s192 = sphi 0, %s178
      %s196 = sphi 0, %s196
      %s198 = sphi 0, %s196
      %s199 = sphi 0, %s198
      %s213 = sphi 0, %s199
      %s217 = sphi 0, %s217
      %s219 = sphi 0, %s217
      %s220 = sphi 0, %s219
      %s234 = sphi 0, %s220
      %s238 = sphi 0, %s238
      %s240 = sphi 0, %s238
      %s241 = sphi 0, %s240
      %s255 = sphi 0, %s241
      %s259 = sphi 0, %s259
      %s261 = sphi 0, %s259
      %s262 = sphi 0, %s261
      %s276 = sphi 0, %s262
      %s280 = sphi 0, %s280
      %s282 = sphi 0, %s280
      %s283 = sphi 0, %s282
      %s297 = sphi 0, %s283
      %s305 = sphi 0, %s307
      %s308 = sphi 0, %s305
      %s309 = sphi 0, %s308
      %s325 = sphi 0, %s309
      %s333 = sphi 0, %s335
      %s336 = sphi 0, %s333
      %s337 = sphi 0, %s336
      %s353 = sphi 0, %s337
    $region4: #{tpu_custom_call.1} parent=1 // loop_header_branch
      %36 = sbr.rel (%p34) target = $region8
    $region5: #{tpu_custom_call.1} parent=1 // loop_body
      %s38 = ssub.s32 %s33, 1
      %s39 = ssub.s32 %s33, 2
      %s46 = sadd.s32 1, %s41
      %p47 = scmp.ge.s32.totalorder %s46, 1
      %s48 = scalar_select %p47, 0, %s46
      %s49 = sadd.s32 1, %s40
      %s50 = scalar_select %p47, %s49, %s40
      %p51 = scmp.ge.s32.totalorder %s50, 2
      %s52 = scalar_select %p51, 0, %s50
      %s53 = ssub.s32 %s40, %s52
      %s54 = ssub.s32 %s41, %s48
      %s55 = sor.u32 %s53, %s54
      %p56 = scmp.eq.s32.totalorder %s55, 0
      %s58 = sadd.s32 %s57, 1
      %s59 = scalar_select %p56, %s57, %s58
      %p62 = pneg %p56
      %p63 = scmp.eq.s32.totalorder %s33, 1
      %p64 = por %p62, %p63
      %p65 = scmp.ne.s32.totalorder %s57, %s60
      %p66 = scmp.eq.s32.totalorder %s33, 0
      %p67 = por %p65, %p66
      %p68 = scmp.ne.s32.totalorder %s57, %s60
      %p69 = scmp.eq.s32.totalorder %s38, 1
      %p70 = por %p68, %p69
      %p71 = scmp.ne.s32.totalorder %s60, %s61
      %p72 = scmp.eq.s32.totalorder %s38, 0
      %p73 = por %p71, %p72
      %p74 = scmp.ne.s32.totalorder %s60, %s61
      %p75 = scmp.eq.s32.totalorder %s39, 1
      %p76 = por %p74, %p75
      %p78 = scmp.ne.s32.totalorder %s61, %s77
      %p79 = scmp.eq.s32.totalorder %s39, 0
      %p80 = por %p78, %p79
      %s81 = ssub.s32 %s40, %s52
      %p82 = scmp.eq.s32.totalorder %s81, 0
      %s84 = sadd.s32 %s83, 1
      %s85 = scalar_select %p82, %s83, %s84
      %p88 = pneg %p82
      %p89 = scmp.eq.s32.totalorder %s33, 1
      %p90 = por %p88, %p89
      %p91 = scmp.ne.s32.totalorder %s83, %s86
      %p92 = scmp.eq.s32.totalorder %s33, 0
      %p93 = por %p91, %p92
      %p94 = scmp.ne.s32.totalorder %s83, %s86
      %p95 = scmp.eq.s32.totalorder %s38, 1
      %p96 = por %p94, %p95
      %p97 = scmp.ne.s32.totalorder %s86, %s87
      %p98 = scmp.eq.s32.totalorder %s38, 0
      %p99 = por %p97, %p98
      %p100 = scmp.ne.s32.totalorder %s86, %s87
      %p101 = scmp.eq.s32.totalorder %s39, 1
      %p102 = por %p100, %p101
      %p104 = scmp.ne.s32.totalorder %s87, %s103
      %p105 = scmp.eq.s32.totalorder %s39, 0
      %p106 = por %p104, %p105
      %s107 = ssub.s32 %s40, %s52
      %p108 = scmp.eq.s32.totalorder %s107, 0
      %s110 = sadd.s32 %s109, 1
      %s111 = scalar_select %p108, %s109, %s110
      %p114 = pneg %p108
      %p115 = scmp.eq.s32.totalorder %s33, 1
      %p116 = por %p114, %p115
      %p117 = scmp.ne.s32.totalorder %s109, %s112
      %p118 = scmp.eq.s32.totalorder %s33, 0
      %p119 = por %p117, %p118
      %p120 = scmp.ne.s32.totalorder %s109, %s112
      %p121 = scmp.eq.s32.totalorder %s38, 1
      %p122 = por %p120, %p121
      %p123 = scmp.ne.s32.totalorder %s112, %s113
      %p124 = scmp.eq.s32.totalorder %s38, 0
      %p125 = por %p123, %p124
      %p126 = scmp.ne.s32.totalorder %s112, %s113
      %p127 = scmp.eq.s32.totalorder %s39, 1
      %p128 = por %p126, %p127
      %p130 = scmp.ne.s32.totalorder %s113, %s129
      %p131 = scmp.eq.s32.totalorder %s39, 0
      %p132 = por %p130, %p131
      %s134 = sadd.s32 %s133, 1
      %p137 = scmp.eq.s32.totalorder %s33, 1
      %p138 = scmp.ne.s32.totalorder %s133, %s135
      %p139 = scmp.eq.s32.totalorder %s33, 0
      %p140 = por %p138, %p139
      %p141 = scmp.ne.s32.totalorder %s133, %s135
      %p142 = scmp.eq.s32.totalorder %s38, 1
      %p143 = por %p141, %p142
      %p144 = scmp.ne.s32.totalorder %s135, %s136
      %p145 = scmp.eq.s32.totalorder %s38, 0
      %p146 = por %p144, %p145
      %p147 = scmp.ne.s32.totalorder %s135, %s136
      %p148 = scmp.eq.s32.totalorder %s39, 1
      %p149 = por %p147, %p148
      %p151 = scmp.ne.s32.totalorder %s136, %s150
      %p152 = scmp.eq.s32.totalorder %s39, 0
      %p153 = por %p151, %p152
      %s155 = sadd.s32 %s154, 1
      %p158 = scmp.eq.s32.totalorder %s33, 1
      %p159 = scmp.ne.s32.totalorder %s154, %s156
      %p160 = scmp.eq.s32.totalorder %s33, 0
      %p161 = por %p159, %p160
      %p162 = scmp.ne.s32.totalorder %s154, %s156
      %p163 = scmp.eq.s32.totalorder %s38, 1
      %p164 = por %p162, %p163
      %p165 = scmp.ne.s32.totalorder %s156, %s157
      %p166 = scmp.eq.s32.totalorder %s38, 0
      %p167 = por %p165, %p166
      %p168 = scmp.ne.s32.totalorder %s156, %s157
      %p169 = scmp.eq.s32.totalorder %s39, 1
      %p170 = por %p168, %p169
      %p172 = scmp.ne.s32.totalorder %s157, %s171
      %p173 = scmp.eq.s32.totalorder %s39, 0
      %p174 = por %p172, %p173
      %s176 = sadd.s32 %s175, 1
      %p179 = scmp.eq.s32.totalorder %s33, 1
      %p180 = scmp.ne.s32.totalorder %s175, %s177
      %p181 = scmp.eq.s32.totalorder %s33, 0
      %p182 = por %p180, %p181
      %p183 = scmp.ne.s32.totalorder %s175, %s177
      %p184 = scmp.eq.s32.totalorder %s38, 1
      %p185 = por %p183, %p184
      %p186 = scmp.ne.s32.totalorder %s177, %s178
      %p187 = scmp.eq.s32.totalorder %s38, 0
      %p188 = por %p186, %p187
      %p189 = scmp.ne.s32.totalorder %s177, %s178
      %p190 = scmp.eq.s32.totalorder %s39, 1
      %p191 = por %p189, %p190
      %p193 = scmp.ne.s32.totalorder %s178, %s192
      %p194 = scmp.eq.s32.totalorder %s39, 0
      %p195 = por %p193, %p194
      %s197 = sadd.s32 %s196, 1
      %p200 = scmp.eq.s32.totalorder %s33, 1
      %p201 = scmp.ne.s32.totalorder %s196, %s198
      %p202 = scmp.eq.s32.totalorder %s33, 0
      %p203 = por %p201, %p202
      %p204 = scmp.ne.s32.totalorder %s196, %s198
      %p205 = scmp.eq.s32.totalorder %s38, 1
      %p206 = por %p204, %p205
      %p207 = scmp.ne.s32.totalorder %s198, %s199
      %p208 = scmp.eq.s32.totalorder %s38, 0
      %p209 = por %p207, %p208
      %p210 = scmp.ne.s32.totalorder %s198, %s199
      %p211 = scmp.eq.s32.totalorder %s39, 1
      %p212 = por %p210, %p211
      %p214 = scmp.ne.s32.totalorder %s199, %s213
      %p215 = scmp.eq.s32.totalorder %s39, 0
      %p216 = por %p214, %p215
      %s218 = sadd.s32 %s217, 1
      %p221 = scmp.eq.s32.totalorder %s33, 1
      %p222 = scmp.ne.s32.totalorder %s217, %s219
      %p223 = scmp.eq.s32.totalorder %s33, 0
      %p224 = por %p222, %p223
      %p225 = scmp.ne.s32.totalorder %s217, %s219
      %p226 = scmp.eq.s32.totalorder %s38, 1
      %p227 = por %p225, %p226
      %p228 = scmp.ne.s32.totalorder %s219, %s220
      %p229 = scmp.eq.s32.totalorder %s38, 0
      %p230 = por %p228, %p229
      %p231 = scmp.ne.s32.totalorder %s219, %s220
      %p232 = scmp.eq.s32.totalorder %s39, 1
      %p233 = por %p231, %p232
      %p235 = scmp.ne.s32.totalorder %s220, %s234
      %p236 = scmp.eq.s32.totalorder %s39, 0
      %p237 = por %p235, %p236
      %s239 = sadd.s32 %s238, 1
      %p242 = scmp.eq.s32.totalorder %s33, 1
      %p243 = scmp.ne.s32.totalorder %s238, %s240
      %p244 = scmp.eq.s32.totalorder %s33, 0
      %p245 = por %p243, %p244
      %p246 = scmp.ne.s32.totalorder %s238, %s240
      %p247 = scmp.eq.s32.totalorder %s38, 1
      %p248 = por %p246, %p247
      %p249 = scmp.ne.s32.totalorder %s240, %s241
      %p250 = scmp.eq.s32.totalorder %s38, 0
      %p251 = por %p249, %p250
      %p252 = scmp.ne.s32.totalorder %s240, %s241
      %p253 = scmp.eq.s32.totalorder %s39, 1
      %p254 = por %p252, %p253
      %p256 = scmp.ne.s32.totalorder %s241, %s255
      %p257 = scmp.eq.s32.totalorder %s39, 0
      %p258 = por %p256, %p257
      %s260 = sadd.s32 %s259, 1
      %p263 = scmp.eq.s32.totalorder %s33, 1
      %p264 = scmp.ne.s32.totalorder %s259, %s261
      %p265 = scmp.eq.s32.totalorder %s33, 0
      %p266 = por %p264, %p265
      %p267 = scmp.ne.s32.totalorder %s259, %s261
      %p268 = scmp.eq.s32.totalorder %s38, 1
      %p269 = por %p267, %p268
      %p270 = scmp.ne.s32.totalorder %s261, %s262
      %p271 = scmp.eq.s32.totalorder %s38, 0
      %p272 = por %p270, %p271
      %p273 = scmp.ne.s32.totalorder %s261, %s262
      %p274 = scmp.eq.s32.totalorder %s39, 1
      %p275 = por %p273, %p274
      %p277 = scmp.ne.s32.totalorder %s262, %s276
      %p278 = scmp.eq.s32.totalorder %s39, 0
      %p279 = por %p277, %p278
      %s281 = sadd.s32 %s280, 1
      %p284 = scmp.eq.s32.totalorder %s33, 1
      %p285 = scmp.ne.s32.totalorder %s280, %s282
      %p286 = scmp.eq.s32.totalorder %s33, 0
      %p287 = por %p285, %p286
      %p288 = scmp.ne.s32.totalorder %s280, %s282
      %p289 = scmp.eq.s32.totalorder %s38, 1
      %p290 = por %p288, %p289
      %p291 = scmp.ne.s32.totalorder %s282, %s283
      %p292 = scmp.eq.s32.totalorder %s38, 0
      %p293 = por %p291, %p292
      %p294 = scmp.ne.s32.totalorder %s282, %s283
      %p295 = scmp.eq.s32.totalorder %s39, 1
      %p296 = por %p294, %p295
      %p298 = scmp.ne.s32.totalorder %s283, %s297
      %p299 = scmp.eq.s32.totalorder %s39, 0
      %p300 = por %p298, %p299
      %s301 = ssub.s32 %s40, %s52
      %s302 = ssub.s32 %s41, %s48
      %s303 = sor.u32 %s301, %s302
      %p304 = scmp.eq.s32.totalorder %s303, 0
      %s306 = sadd.s32 %s305, 1
      %s307 = scalar_select %p304, %s305, %s306
      %p310 = pneg %p304
      %p311 = scmp.eq.s32.totalorder %s33, 1
      %p312 = por %p310, %p311
      %p313 = scmp.ne.s32.totalorder %s305, %s308
      %p314 = scmp.eq.s32.totalorder %s33, 0
      %p315 = por %p313, %p314
      %p316 = scmp.ne.s32.totalorder %s305, %s308
      %p317 = scmp.eq.s32.totalorder %s38, 1
      %p318 = por %p316, %p317
      %p319 = scmp.ne.s32.totalorder %s308, %s309
      %p320 = scmp.eq.s32.totalorder %s38, 0
      %p321 = por %p319, %p320
      %p322 = scmp.ne.s32.totalorder %s308, %s309
      %p323 = scmp.eq.s32.totalorder %s39, 1
      %p324 = por %p322, %p323
      %p326 = scmp.ne.s32.totalorder %s309, %s325
      %p327 = scmp.eq.s32.totalorder %s39, 0
      %p328 = por %p326, %p327
      %s329 = ssub.s32 %s40, %s52
      %s330 = ssub.s32 %s41, %s48
      %s331 = sor.u32 %s329, %s330
      %p332 = scmp.eq.s32.totalorder %s331, 0
      %s334 = sadd.s32 %s333, 1
      %s335 = scalar_select %p332, %s333, %s334
      %p338 = pneg %p332
      %p339 = scmp.eq.s32.totalorder %s33, 1
      %p340 = por %p338, %p339
      %p341 = scmp.ne.s32.totalorder %s333, %s336
      %p342 = scmp.eq.s32.totalorder %s33, 0
      %p343 = por %p341, %p342
      %p344 = scmp.ne.s32.totalorder %s333, %s336
      %p345 = scmp.eq.s32.totalorder %s38, 1
      %p346 = por %p344, %p345
      %p347 = scmp.ne.s32.totalorder %s336, %s337
      %p348 = scmp.eq.s32.totalorder %s38, 0
      %p349 = por %p347, %p348
      %p350 = scmp.ne.s32.totalorder %s336, %s337
      %p351 = scmp.eq.s32.totalorder %s39, 1
      %p352 = por %p350, %p351
      %p354 = scmp.ne.s32.totalorder %s337, %s353
      %p355 = scmp.eq.s32.totalorder %s39, 0
      %p356 = por %p354, %p355
      %p357 = scmp.le.s32.totalorder 1, %s33
      %p358 = scmp.lt.s32.totalorder %s33, 3
      %p359 = pnand %p357, %p358
      %p360 = pneg %p359
      // Predicated region
      $region9: #{tpu_custom_call.1} parent=5 // pred_check
        _
      $region10: #{tpu_custom_call.1} parent=5 // pred_check_branch
        %362 = sbr.rel (%p359) target = $region12
      $region11: #{tpu_custom_call.1} parent=5 // pred_region
        %s363 = ssub.s32 %s33, 1
        // Predicated region
        $region13: #{tpu_custom_call.1} parent=11 // pred_check
          %p364 = pneg %p146
        $region14: #{tpu_custom_call.1} parent=11 // pred_check_branch
          %366 = sbr.rel (%p364) target = $region16
        $region15: #{tpu_custom_call.1} parent=11 // pred_region
          %s368 = ssub.s32 512, 512
          %369 = vsyncadd [#allocation9], %s368
          %s370 = sshll.u32 [#allocation8], 4
          %s371 = int_to_ptr.vmem [resolvable:$true] %s370
          %376 = dma.hbm_to_vmem [thread:$0]  %s3, 512, %s371, [#allocation9], 128, 128, 8
        $region16: #{tpu_custom_call.1} parent=11 // pred_fallthru
          _
        // Predicated region
        $region17: #{tpu_custom_call.1} parent=11 // pred_check
          %p377 = pneg %p167
        $region18: #{tpu_custom_call.1} parent=11 // pred_check_branch
          %379 = sbr.rel (%p377) target = $region20
        $region19: #{tpu_custom_call.1} parent=11 // pred_region
          _
        $region20: #{tpu_custom_call.1} parent=11 // pred_fallthru
          _
        // Predicated region
        $region21: #{tpu_custom_call.1} parent=11 // pred_check
          %p380 = pneg %p188
        $region22: #{tpu_custom_call.1} parent=11 // pred_check_branch
          %382 = sbr.rel (%p380) target = $region24
        $region23: #{tpu_custom_call.1} parent=11 // pred_region
          %s384 = ssub.s32 512, 512
          %385 = vsyncadd [#allocation9], %s384
          %s386 = sshll.u32 [#allocation10], 4
          %s387 = int_to_ptr.vmem [resolvable:$true] %s386
          %392 = dma.hbm_to_vmem [thread:$0]  %s5, 512, %s387, [#allocation9], 128, 128, 8
        $region24: #{tpu_custom_call.1} parent=11 // pred_fallthru
          _
        // Predicated region
        $region25: #{tpu_custom_call.1} parent=11 // pred_check
          %p393 = pneg %p209
        $region26: #{tpu_custom_call.1} parent=11 // pred_check_branch
          %395 = sbr.rel (%p393) target = $region28
        $region27: #{tpu_custom_call.1} parent=11 // pred_region
          _
        $region28: #{tpu_custom_call.1} parent=11 // pred_fallthru
          _
        // Predicated region
        $region29: #{tpu_custom_call.1} parent=11 // pred_check
          %p396 = pneg %p230
        $region30: #{tpu_custom_call.1} parent=11 // pred_check_branch
          %398 = sbr.rel (%p396) target = $region32
        $region31: #{tpu_custom_call.1} parent=11 // pred_region
          %s400 = ssub.s32 512, 512
          %401 = vsyncadd [#allocation12], %s400
          %s402 = sshll.u32 [#allocation11], 4
          %s403 = int_to_ptr.vmem [resolvable:$true] %s402
          %408 = dma.hbm_to_vmem [thread:$0]  %s7, 512, %s403, [#allocation12], 128, 128, 8
        $region32: #{tpu_custom_call.1} parent=11 // pred_fallthru
          _
        // Predicated region
        $region33: #{tpu_custom_call.1} parent=11 // pred_check
          %p409 = pneg %p251
        $region34: #{tpu_custom_call.1} parent=11 // pred_check_branch
          %411 = sbr.rel (%p409) target = $region36
        $region35: #{tpu_custom_call.1} parent=11 // pred_region
          _
        $region36: #{tpu_custom_call.1} parent=11 // pred_fallthru
          _
        // Predicated region
        $region37: #{tpu_custom_call.1} parent=11 // pred_check
          %p412 = pneg %p272
        $region38: #{tpu_custom_call.1} parent=11 // pred_check_branch
          %414 = sbr.rel (%p412) target = $region40
        $region39: #{tpu_custom_call.1} parent=11 // pred_region
          %s416 = ssub.s32 512, 512
          %417 = vsyncadd [#allocation12], %s416
          %s418 = sshll.u32 [#allocation13], 4
          %s419 = int_to_ptr.vmem [resolvable:$true] %s418
          %424 = dma.hbm_to_vmem [thread:$0]  %s9, 512, %s419, [#allocation12], 128, 128, 8
        $region40: #{tpu_custom_call.1} parent=11 // pred_fallthru
          _
        // Predicated region
        $region41: #{tpu_custom_call.1} parent=11 // pred_check
          %p425 = pneg %p293
        $region42: #{tpu_custom_call.1} parent=11 // pred_check_branch
          %427 = sbr.rel (%p425) target = $region44
        $region43: #{tpu_custom_call.1} parent=11 // pred_region
          _
        $region44: #{tpu_custom_call.1} parent=11 // pred_fallthru
          _
      $region12: #{tpu_custom_call.1} parent=5 // pred_fallthru
        _
      %p428 = scmp.lt.s32.totalorder %s33, 2
      // Predicated region
      $region45: #{tpu_custom_call.1} parent=5 // pred_check
        %p429 = pneg %p428
      $region46: #{tpu_custom_call.1} parent=5 // pred_check_branch
        %431 = sbr.rel (%p429) target = $region48
      $region47: #{tpu_custom_call.1} parent=5 // pred_region
        // Predicated region
        $region49: #{tpu_custom_call.1} parent=47 // pred_check
          %p432 = pneg %p67
        $region50: #{tpu_custom_call.1} parent=47 // pred_check_branch
          %434 = sbr.rel (%p432) target = $region52
        $region51: #{tpu_custom_call.1} parent=47 // pred_region
          %s435 = sand.u32 %s57, 1
          %s436 = scalar_lea.sflag [#allocation3], %s435
          %s437 = sand.u32 %s57, 1
          %s438 = smul.addr %s437, 8
          %s439 = scalar_lea.vmem [#allocation2], %s438
          %s441 = ssub.s32 128, 128
          %442 = vsyncadd %s436, %s441
          %s443 = sadd.s32 %s41, %s40
          %s444 = smul.addr %s443, 128
          %s445 = scalar_lea.hbm %s0, %s444
          %s447 = sshll.u32 %s439, 4
          %s448 = int_to_ptr.vmem [resolvable:$true] %s447
          %450 = dma.hbm_to_vmem [thread:$0]  %s445, 128, %s448, %s436
        $region52: #{tpu_custom_call.1} parent=47 // pred_fallthru
          _
        // Predicated region
        $region53: #{tpu_custom_call.1} parent=47 // pred_check
          %p451 = pneg %p93
        $region54: #{tpu_custom_call.1} parent=47 // pred_check_branch
          %453 = sbr.rel (%p451) target = $region56
        $region55: #{tpu_custom_call.1} parent=47 // pred_region
          %s454 = sand.u32 %s33, 1
          %s455 = scalar_lea.sflag [#allocation6], %s454
          %s456 = sand.u32 %s83, 1
          %s457 = smul.addr %s456, 8
          %s458 = scalar_lea.vmem [#allocation5], %s457
          %s460 = ssub.s32 128, 128
          %461 = vsyncadd %s455, %s460
          %s462 = smul.addr %s40, 128
          %s463 = scalar_lea.hbm %s1, %s462
          %s465 = sshll.u32 %s458, 4
          %s466 = int_to_ptr.vmem [resolvable:$true] %s465
          %468 = dma.hbm_to_vmem [thread:$0]  %s463, 128, %s466, %s455
        $region56: #{tpu_custom_call.1} parent=47 // pred_fallthru
          _
        // Predicated region
        $region57: #{tpu_custom_call.1} parent=47 // pred_check
          %p469 = pneg %p119
        $region58: #{tpu_custom_call.1} parent=47 // pred_check_branch
          %471 = sbr.rel (%p469) target = $region60
        $region59: #{tpu_custom_call.1} parent=47 // pred_region
          %s472 = sand.u32 %s33, 1
          %s473 = scalar_lea.sflag [#allocation6], %s472
          %s474 = sand.u32 %s109, 1
          %s475 = smul.addr %s474, 8
          %s476 = scalar_lea.vmem [#allocation7], %s475
          %s478 = ssub.s32 128, 128
          %479 = vsyncadd %s473, %s478
          %s480 = smul.addr %s40, 128
          %s481 = scalar_lea.hbm %s2, %s480
          %s483 = sshll.u32 %s476, 4
          %s484 = int_to_ptr.vmem [resolvable:$true] %s483
          %486 = dma.hbm_to_vmem [thread:$0]  %s481, 128, %s484, %s473
        $region60: #{tpu_custom_call.1} parent=47 // pred_fallthru
          _
      $region48: #{tpu_custom_call.1} parent=5 // pred_fallthru
        _
      %p487 = scmp.le.s32.totalorder 1, %s33
      %p488 = scmp.lt.s32.totalorder %s33, 3
      %p489 = pnand %p487, %p488
      %p490 = pneg %p489
      // Predicated region
      $region61: #{tpu_custom_call.1} parent=5 // pred_check
        _
      $region62: #{tpu_custom_call.1} parent=5 // pred_check_branch
        %492 = sbr.rel (%p489) target = $region64
      $region63: #{tpu_custom_call.1} parent=5 // pred_region
        %s493 = ssub.s32 %s33, 1
        %s494 = sand.u32 %s60, 1
        %s495 = scalar_lea.sflag [#allocation3], %s494
        %s496 = sand.u32 %s60, 1
        %s497 = smul.addr %s496, 8
        %s498 = scalar_lea.vmem [#allocation2], %s497
        // Predicated region
        $region65: #{tpu_custom_call.1} parent=63 // pred_check
          %p499 = pneg %p73
        $region66: #{tpu_custom_call.1} parent=63 // pred_check_branch
          %501 = sbr.rel (%p499) target = $region68
        $region67: #{tpu_custom_call.1} parent=63 // pred_region
          %502 = dma.done %s495, 128
        $region68: #{tpu_custom_call.1} parent=63 // pred_fallthru
          _
        %s503 = sand.u32 %s38, 1
        %s504 = scalar_lea.sflag [#allocation6], %s503
        %s505 = sand.u32 %s86, 1
        %s506 = smul.addr %s505, 8
        %s507 = scalar_lea.vmem [#allocation5], %s506
        // Predicated region
        $region69: #{tpu_custom_call.1} parent=63 // pred_check
          %p508 = pneg %p99
        $region70: #{tpu_custom_call.1} parent=63 // pred_check_branch
          %510 = sbr.rel (%p508) target = $region72
        $region71: #{tpu_custom_call.1} parent=63 // pred_region
          %511 = dma.done %s504, 128
        $region72: #{tpu_custom_call.1} parent=63 // pred_fallthru
          _
        %s512 = sand.u32 %s38, 1
        %s513 = scalar_lea.sflag [#allocation6], %s512
        %s514 = sand.u32 %s112, 1
        %s515 = smul.addr %s514, 8
        %s516 = scalar_lea.vmem [#allocation7], %s515
        // Predicated region
        $region73: #{tpu_custom_call.1} parent=63 // pred_check
          %p517 = pneg %p125
        $region74: #{tpu_custom_call.1} parent=63 // pred_check_branch
          %519 = sbr.rel (%p517) target = $region76
        $region75: #{tpu_custom_call.1} parent=63 // pred_region
          %520 = dma.done %s513, 128
        $region76: #{tpu_custom_call.1} parent=63 // pred_fallthru
          _
        // Predicated region
        $region77: #{tpu_custom_call.1} parent=63 // pred_check
          %p521 = pneg %p146
        $region78: #{tpu_custom_call.1} parent=63 // pred_check_branch
          %523 = sbr.rel (%p521) target = $region80
        $region79: #{tpu_custom_call.1} parent=63 // pred_region
          %524 = dma.done [#allocation9], 512
        $region80: #{tpu_custom_call.1} parent=63 // pred_fallthru
          _
        // Predicated region
        $region81: #{tpu_custom_call.1} parent=63 // pred_check
          %p525 = pneg %p188
        $region82: #{tpu_custom_call.1} parent=63 // pred_check_branch
          %527 = sbr.rel (%p525) target = $region84
        $region83: #{tpu_custom_call.1} parent=63 // pred_region
          %528 = dma.done [#allocation9], 512
        $region84: #{tpu_custom_call.1} parent=63 // pred_fallthru
          _
        // Predicated region
        $region85: #{tpu_custom_call.1} parent=63 // pred_check
          %p529 = pneg %p230
        $region86: #{tpu_custom_call.1} parent=63 // pred_check_branch
          %531 = sbr.rel (%p529) target = $region88
        $region87: #{tpu_custom_call.1} parent=63 // pred_region
          %532 = dma.done [#allocation12], 512
        $region88: #{tpu_custom_call.1} parent=63 // pred_fallthru
          _
        // Predicated region
        $region89: #{tpu_custom_call.1} parent=63 // pred_check
          %p533 = pneg %p272
        $region90: #{tpu_custom_call.1} parent=63 // pred_check_branch
          %535 = sbr.rel (%p533) target = $region92
        $region91: #{tpu_custom_call.1} parent=63 // pred_region
          %536 = dma.done [#allocation12], 512
        $region92: #{tpu_custom_call.1} parent=63 // pred_fallthru
          _
        %s537 = sand.u32 %s60, 1
        %s538 = scalar_lea.sflag [#allocation3], %s537
        %s539 = sand.u32 %s60, 1
        %s540 = smul.addr %s539, 8
        %s541 = scalar_lea.vmem [#allocation2], %s540
        %p542 = pneg %p73
        %p543 = pneg %p70
        %s544 = sand.u32 %s38, 1
        %s545 = scalar_lea.sflag [#allocation6], %s544
        %s546 = sand.u32 %s86, 1
        %s547 = smul.addr %s546, 8
        %s548 = scalar_lea.vmem [#allocation5], %s547
        %p549 = pneg %p99
        %p550 = pneg %p96
        %s551 = sand.u32 %s38, 1
        %s552 = scalar_lea.sflag [#allocation6], %s551
        %s553 = sand.u32 %s112, 1
        %s554 = smul.addr %s553, 8
        %s555 = scalar_lea.vmem [#allocation7], %s554
        %p556 = pneg %p125
        %p557 = pneg %p122
        %p558 = pneg %p146
        %p559 = pneg %p143
        %p560 = pneg %p167
        %p561 = pneg %p164
        %p562 = pneg %p188
        %p563 = pneg %p185
        %p564 = pneg %p209
        %p565 = pneg %p206
        %p566 = pneg %p230
        %p567 = pneg %p227
        %p568 = pneg %p251
        %p569 = pneg %p248
        %p570 = pneg %p272
        %p571 = pneg %p269
        %p572 = pneg %p293
        %p573 = pneg %p290
        %p574 = pneg %p321
        %p575 = pneg %p318
        %s576 = sand.u32 %s308, 1
        %s577 = scalar_lea.sflag [#allocation4], %s576
        %s578 = sand.u32 %s308, 1
        %s579 = smul.addr %s578, 8
        %s580 = scalar_lea.vmem [#allocation14], %s579
        %p581 = pneg %p349
        %p582 = pneg %p346
        %s583 = sand.u32 %s336, 1
        %s584 = scalar_lea.sflag [#allocation16], %s583
        %s585 = sand.u32 %s336, 1
        %s586 = smul.addr %s585, 32
        %s587 = scalar_lea.vmem [#allocation15], %s586
        %v588 = vld [vmem:[%s498] sm:$0xff]
        %v589 = vld [vmem:[%s507] sm:$0xff]
        %v590 = vld [vmem:[%s516] sm:$0xff]
        %v591 = vld [vmem:[#allocation8] sm:$0xff]
        %v592 = vld [vmem:[#allocation8 + $0x8] sm:$0xff]
        %v593 = vld [vmem:[#allocation8 + $0x10] sm:$0xff]
        %v594 = vld [vmem:[#allocation8 + $0x18] sm:$0xff]
        %v595 = vld [vmem:[%s4] sm:$0x1]
        %v597 = vlaneseq
        %v598 = vshrl.u32 %v597, 7
        %v599 = vsub.s32 0, %v598
        %v600 = vrot.slane %v595, %v599
        %vm602 = vcmask 261120
        %v604 = vsel %vm602, %v588, 0
        %606 = vmatprep.subr.mxu0 0.0
        %607 = vmatpush1.msra.mxu0 0.0
        %608 = vmatprep.subr.mxu0 0.0
        %609 = vmatpush1.msra.mxu0 0.0
        %610 = vmatprep.subr.mxu0 0.0
        %611 = vmatpush1.msra.mxu0 0.0
        %612 = vmatprep.subr.mxu0 0.0
        %613 = vmatpush1.msra.mxu0 0.0
        %614 = vmatprep.subr.mxu0 0.0
        %615 = vmatpush1.msra.mxu0 0.0
        %616 = vmatprep.subr.mxu0 0.0
        %617 = vmatpush1.msra.mxu0 0.0
        %618 = vmatprep.subr.mxu0 0.0
        %619 = vmatpush1.msra.mxu0 0.0
        %620 = vmatprep.subr.mxu0 0.0
        %621 = vmatpush1.msra.mxu0 0.0
        %622 = vmatprep.subr.mxu0 0.0
        %623 = vmatpush1.msra.mxu0 0.0
        %624 = vmatprep.subr.mxu0 0.0
        %625 = vmatpush1.msra.mxu0 0.0
        %626 = vmatprep.subr.mxu0 0.0
        %627 = vmatpush1.msra.mxu0 0.0
        %628 = vmatprep.subr.mxu0 0.0
        %629 = vmatpush1.msra.mxu0 0.0
        %630 = vmatprep.subr.mxu0 0.0
        %631 = vmatpush1.msra.mxu0 %v594
        %632 = vmatprep.subr.mxu0 0.0
        %633 = vmatpush1.msra.mxu0 %v593
        %634 = vmatprep.subr.mxu0 0.0
        %635 = vmatpush1.msra.mxu0 %v592
        %636 = vmatprep.subr.mxu0 0.0
        %637 = vmatpush1.msra.mxu0 %v591
        %638 = vmatprep.subr.mxu0 0.0
        %639 = vmatpush2.msra.mxu0 0.0
        %640 = vmatprep.subr.mxu0 0.0
        %641 = vmatpush2.msra.mxu0 0.0
        %642 = vmatprep.subr.mxu0 0.0
        %643 = vmatpush2.msra.mxu0 0.0
        %644 = vmatprep.subr.mxu0 0.0
        %645 = vmatpush2.msra.mxu0 0.0
        %646 = vmatprep.subr.mxu0 0.0
        %647 = vmatpush2.msra.mxu0 0.0
        %648 = vmatprep.subr.mxu0 0.0
        %649 = vmatpush2.msra.mxu0 0.0
        %650 = vmatprep.subr.mxu0 0.0
        %651 = vmatpush2.msra.mxu0 0.0
        %652 = vmatprep.subr.mxu0 0.0
        %653 = vmatpush2.msra.mxu0 0.0
        %654 = vmatprep.subr.mxu0 0.0
        %655 = vmatpush2.msra.mxu0 0.0
        %656 = vmatprep.subr.mxu0 0.0
        %657 = vmatpush2.msra.mxu0 0.0
        %658 = vmatprep.subr.mxu0 0.0
        %659 = vmatpush2.msra.mxu0 0.0
        %660 = vmatprep.subr.mxu0 0.0
        %661 = vmatpush2.msra.mxu0 0.0
        %662 = vmatprep.subr.mxu0 0.0
        %663 = vmatpush2.msra.mxu0 0.0
        %664 = vmatprep.subr.mxu0 0.0
        %665 = vmatpush2.msra.mxu0 0.0
        %666 = vmatprep.subr.mxu0 0.0
        %667 = vmatpush2.msra.mxu0 0.0
        %668 = vmatprep.subr.mxu0 0.0
        %669 = vmatpush2.msra.mxu0 0.0
        %670 = vmatprep.mubr.f32.mxu0 0.0
        %671 = vmatmul.mubr.f32.gmra.mxu0 %v604
        %v672 = vpop.f32.mrf.mxu0
        %v673 = vadd.f32 %v600, %v672
        %v674 = vpop.f32.mrf.mxu0
        %675 = vdwg.mxu0
        %v676 = vmul.f32 %v673, 0.35355338
        %v677 = vld [vmem:[#allocation10] sm:$0xff]
        %v678 = vld [vmem:[#allocation10 + $0x8] sm:$0xff]
        %v679 = vld [vmem:[#allocation10 + $0x10] sm:$0xff]
        %v680 = vld [vmem:[#allocation10 + $0x18] sm:$0xff]
        %v681 = vld [vmem:[%s6] sm:$0x1]
        %v683 = vlaneseq
        %v684 = vshrl.u32 %v683, 7
        %v685 = vsub.s32 0, %v684
        %v686 = vrot.slane %v681, %v685
        %v689 = vsel %vm602, %v589, 0
        %691 = vmatprep.subr.mxu0 0.0
        %692 = vmatpush1.msra.mxu0 0.0
        %693 = vmatprep.subr.mxu0 0.0
        %694 = vmatpush1.msra.mxu0 0.0
        %695 = vmatprep.subr.mxu0 0.0
        %696 = vmatpush1.msra.mxu0 0.0
        %697 = vmatprep.subr.mxu0 0.0
        %698 = vmatpush1.msra.mxu0 0.0
        %699 = vmatprep.subr.mxu0 0.0
        %700 = vmatpush1.msra.mxu0 0.0
        %701 = vmatprep.subr.mxu0 0.0
        %702 = vmatpush1.msra.mxu0 0.0
        %703 = vmatprep.subr.mxu0 0.0
        %704 = vmatpush1.msra.mxu0 0.0
        %705 = vmatprep.subr.mxu0 0.0
        %706 = vmatpush1.msra.mxu0 0.0
        %707 = vmatprep.subr.mxu0 0.0
        %708 = vmatpush1.msra.mxu0 0.0
        %709 = vmatprep.subr.mxu0 0.0
        %710 = vmatpush1.msra.mxu0 0.0
        %711 = vmatprep.subr.mxu0 0.0
        %712 = vmatpush1.msra.mxu0 0.0
        %713 = vmatprep.subr.mxu0 0.0
        %714 = vmatpush1.msra.mxu0 0.0
        %715 = vmatprep.subr.mxu0 0.0
        %716 = vmatpush1.msra.mxu0 %v680
        %717 = vmatprep.subr.mxu0 0.0
        %718 = vmatpush1.msra.mxu0 %v679
        %719 = vmatprep.subr.mxu0 0.0
        %720 = vmatpush1.msra.mxu0 %v678
        %721 = vmatprep.subr.mxu0 0.0
        %722 = vmatpush1.msra.mxu0 %v677
        %723 = vmatprep.subr.mxu0 0.0
        %724 = vmatpush2.msra.mxu0 0.0
        %725 = vmatprep.subr.mxu0 0.0
        %726 = vmatpush2.msra.mxu0 0.0
        %727 = vmatprep.subr.mxu0 0.0
        %728 = vmatpush2.msra.mxu0 0.0
        %729 = vmatprep.subr.mxu0 0.0
        %730 = vmatpush2.msra.mxu0 0.0
        %731 = vmatprep.subr.mxu0 0.0
        %732 = vmatpush2.msra.mxu0 0.0
        %733 = vmatprep.subr.mxu0 0.0
        %734 = vmatpush2.msra.mxu0 0.0
        %735 = vmatprep.subr.mxu0 0.0
        %736 = vmatpush2.msra.mxu0 0.0
        %737 = vmatprep.subr.mxu0 0.0
        %738 = vmatpush2.msra.mxu0 0.0
        %739 = vmatprep.subr.mxu0 0.0
        %740 = vmatpush2.msra.mxu0 0.0
        %741 = vmatprep.subr.mxu0 0.0
        %742 = vmatpush2.msra.mxu0 0.0
        %743 = vmatprep.subr.mxu0 0.0
        %744 = vmatpush2.msra.mxu0 0.0
        %745 = vmatprep.subr.mxu0 0.0
        %746 = vmatpush2.msra.mxu0 0.0
        %747 = vmatprep.subr.mxu0 0.0
        %748 = vmatpush2.msra.mxu0 0.0
        %749 = vmatprep.subr.mxu0 0.0
        %750 = vmatpush2.msra.mxu0 0.0
        %751 = vmatprep.subr.mxu0 0.0
        %752 = vmatpush2.msra.mxu0 0.0
        %753 = vmatprep.subr.mxu0 0.0
        %754 = vmatpush2.msra.mxu0 0.0
        %755 = vmatprep.mubr.f32.mxu0 0.0
        %756 = vmatmul.mubr.f32.gmra.mxu0 %v689
        %v757 = vpop.f32.mrf.mxu0
        %v758 = vadd.f32 %v686, %v757
        %v759 = vpop.f32.mrf.mxu0
        %760 = vdwg.mxu0
        %v761 = vld [vmem:[#allocation11] sm:$0xff]
        %v762 = vld [vmem:[#allocation11 + $0x8] sm:$0xff]
        %v763 = vld [vmem:[#allocation11 + $0x10] sm:$0xff]
        %v764 = vld [vmem:[#allocation11 + $0x18] sm:$0xff]
        %v765 = vld [vmem:[%s8] sm:$0x1]
        %v767 = vlaneseq
        %v768 = vshrl.u32 %v767, 7
        %v769 = vsub.s32 0, %v768
        %v770 = vrot.slane %v765, %v769
        %v773 = vsel %vm602, %v590, 0
        %775 = vmatprep.subr.mxu0 0.0
        %776 = vmatpush1.msra.mxu0 0.0
        %777 = vmatprep.subr.mxu0 0.0
        %778 = vmatpush1.msra.mxu0 0.0
        %779 = vmatprep.subr.mxu0 0.0
        %780 = vmatpush1.msra.mxu0 0.0
        %781 = vmatprep.subr.mxu0 0.0
        %782 = vmatpush1.msra.mxu0 0.0
        %783 = vmatprep.subr.mxu0 0.0
        %784 = vmatpush1.msra.mxu0 0.0
        %785 = vmatprep.subr.mxu0 0.0
        %786 = vmatpush1.msra.mxu0 0.0
        %787 = vmatprep.subr.mxu0 0.0
        %788 = vmatpush1.msra.mxu0 0.0
        %789 = vmatprep.subr.mxu0 0.0
        %790 = vmatpush1.msra.mxu0 0.0
        %791 = vmatprep.subr.mxu0 0.0
        %792 = vmatpush1.msra.mxu0 0.0
        %793 = vmatprep.subr.mxu0 0.0
        %794 = vmatpush1.msra.mxu0 0.0
        %795 = vmatprep.subr.mxu0 0.0
        %796 = vmatpush1.msra.mxu0 0.0
        %797 = vmatprep.subr.mxu0 0.0
        %798 = vmatpush1.msra.mxu0 0.0
        %799 = vmatprep.subr.mxu0 0.0
        %800 = vmatpush1.msra.mxu0 %v764
        %801 = vmatprep.subr.mxu0 0.0
        %802 = vmatpush1.msra.mxu0 %v763
        %803 = vmatprep.subr.mxu0 0.0
        %804 = vmatpush1.msra.mxu0 %v762
        %805 = vmatprep.subr.mxu0 0.0
        %806 = vmatpush1.msra.mxu0 %v761
        %807 = vmatprep.subr.mxu0 0.0
        %808 = vmatpush2.msra.mxu0 0.0
        %809 = vmatprep.subr.mxu0 0.0
        %810 = vmatpush2.msra.mxu0 0.0
        %811 = vmatprep.subr.mxu0 0.0
        %812 = vmatpush2.msra.mxu0 0.0
        %813 = vmatprep.subr.mxu0 0.0
        %814 = vmatpush2.msra.mxu0 0.0
        %815 = vmatprep.subr.mxu0 0.0
        %816 = vmatpush2.msra.mxu0 0.0
        %817 = vmatprep.subr.mxu0 0.0
        %818 = vmatpush2.msra.mxu0 0.0
        %819 = vmatprep.subr.mxu0 0.0
        %820 = vmatpush2.msra.mxu0 0.0
        %821 = vmatprep.subr.mxu0 0.0
        %822 = vmatpush2.msra.mxu0 0.0
        %823 = vmatprep.subr.mxu0 0.0
        %824 = vmatpush2.msra.mxu0 0.0
        %825 = vmatprep.subr.mxu0 0.0
        %826 = vmatpush2.msra.mxu0 0.0
        %827 = vmatprep.subr.mxu0 0.0
        %828 = vmatpush2.msra.mxu0 0.0
        %829 = vmatprep.subr.mxu0 0.0
        %830 = vmatpush2.msra.mxu0 0.0
        %831 = vmatprep.subr.mxu0 0.0
        %832 = vmatpush2.msra.mxu0 0.0
        %833 = vmatprep.subr.mxu0 0.0
        %834 = vmatpush2.msra.mxu0 0.0
        %835 = vmatprep.subr.mxu0 0.0
        %836 = vmatpush2.msra.mxu0 0.0
        %837 = vmatprep.subr.mxu0 0.0
        %838 = vmatpush2.msra.mxu0 0.0
        %839 = vmatprep.mubr.f32.mxu0 0.0
        %840 = vmatmul.mubr.f32.gmra.mxu0 %v773
        %v841 = vpop.f32.mrf.mxu0
        %v842 = vadd.f32 %v770, %v841
        %v843 = vpop.f32.mrf.mxu0
        %844 = vdwg.mxu0
        %vm845 = vcmask 64512
        %v847 = vsel %vm845, %v676, 0
        %v850 = vsel %vm845, %v758, 0
        %852 = vmatprep.subr.mxu0 0.0
        %853 = vmatpush1.xpose.msra.mxu0 0.0
        %854 = vmatprep.subr.mxu0 0.0
        %855 = vmatpush1.xpose.msra.mxu0 0.0
        %856 = vmatprep.subr.mxu0 0.0
        %857 = vmatpush1.xpose.msra.mxu0 0.0
        %858 = vmatprep.subr.mxu0 0.0
        %859 = vmatpush1.xpose.msra.mxu0 0.0
        %860 = vmatprep.subr.mxu0 0.0
        %861 = vmatpush1.xpose.msra.mxu0 0.0
        %862 = vmatprep.subr.mxu0 0.0
        %863 = vmatpush1.xpose.msra.mxu0 0.0
        %864 = vmatprep.subr.mxu0 0.0
        %865 = vmatpush1.xpose.msra.mxu0 0.0
        %866 = vmatprep.subr.mxu0 0.0
        %867 = vmatpush1.xpose.msra.mxu0 0.0
        %868 = vmatprep.subr.mxu0 0.0
        %869 = vmatpush1.xpose.msra.mxu0 0.0
        %870 = vmatprep.subr.mxu0 0.0
        %871 = vmatpush1.xpose.msra.mxu0 0.0
        %872 = vmatprep.subr.mxu0 0.0
        %873 = vmatpush1.xpose.msra.mxu0 0.0
        %874 = vmatprep.subr.mxu0 0.0
        %875 = vmatpush1.xpose.msra.mxu0 0.0
        %876 = vmatprep.subr.mxu0 0.0
        %877 = vmatpush1.xpose.msra.mxu0 0.0
        %878 = vmatprep.subr.mxu0 0.0
        %879 = vmatpush1.xpose.msra.mxu0 0.0
        %880 = vmatprep.subr.mxu0 0.0
        %881 = vmatpush1.xpose.msra.mxu0 0.0
        %882 = vmatprep.subr.mxu0 0.0
        %883 = vmatpush1.xpose.msra.mxu0 %v850
        %884 = vmatprep.subr.mxu0 0.0
        %885 = vmatpush2.xpose.msra.mxu0 0.0
        %886 = vmatprep.subr.mxu0 0.0
        %887 = vmatpush2.xpose.msra.mxu0 0.0
        %888 = vmatprep.subr.mxu0 0.0
        %889 = vmatpush2.xpose.msra.mxu0 0.0
        %890 = vmatprep.subr.mxu0 0.0
        %891 = vmatpush2.xpose.msra.mxu0 0.0
        %892 = vmatprep.subr.mxu0 0.0
        %893 = vmatpush2.xpose.msra.mxu0 0.0
        %894 = vmatprep.subr.mxu0 0.0
        %895 = vmatpush2.xpose.msra.mxu0 0.0
        %896 = vmatprep.subr.mxu0 0.0
        %897 = vmatpush2.xpose.msra.mxu0 0.0
        %898 = vmatprep.subr.mxu0 0.0
        %899 = vmatpush2.xpose.msra.mxu0 0.0
        %900 = vmatprep.subr.mxu0 0.0
        %901 = vmatpush2.xpose.msra.mxu0 0.0
        %902 = vmatprep.subr.mxu0 0.0
        %903 = vmatpush2.xpose.msra.mxu0 0.0
        %904 = vmatprep.subr.mxu0 0.0
        %905 = vmatpush2.xpose.msra.mxu0 0.0
        %906 = vmatprep.subr.mxu0 0.0
        %907 = vmatpush2.xpose.msra.mxu0 0.0
        %908 = vmatprep.subr.mxu0 0.0
        %909 = vmatpush2.xpose.msra.mxu0 0.0
        %910 = vmatprep.subr.mxu0 0.0
        %911 = vmatpush2.xpose.msra.mxu0 0.0
        %912 = vmatprep.subr.mxu0 0.0
        %913 = vmatpush2.xpose.msra.mxu0 0.0
        %914 = vmatprep.subr.mxu0 0.0
        %915 = vmatpush2.xpose.msra.mxu0 0.0
        %916 = vmatprep.mubr.f32.mxu0 0.0
        %917 = vmatmul.mubr.f32.gmra.mxu0 %v847
        %v918 = vpop.f32.mrf.mxu0
        %v919 = vadd.f32 0.0, %v918
        %v920 = vpop.f32.mrf.mxu0
        %921 = vdwg.mxu0
        %v922 = vsel %vm845, %v919, -inf
        %923 = vmax.xlane.f32.xlu0 %v922
        %v924 = vpop.xlane.xlu0 %923
        %v925 = vsub.f32 %v919, %v924
        %v926 = vmul.f32 %v925, 1.442695
        %v927 = vpow.pop %v926
        %v928 = vsel %vm845, %v927, 0.0
        %929 = vadd.xlane.f32.xlu0 %v928
        %v930 = vpop.xlane.xlu0 %929
        %v931 = vrcp.pop %v930
        %v932 = vmul.f32 %v927, %v931
        %933 = vst.msk [vmem:[%s587] sm:$0xff] %vm845, %v932
        %v935 = vsel %vm845, %v932, 0
        %937 = vmatprep.subr.mxu0 0.0
        %938 = vmatpush1.msra.mxu0 0.0
        %939 = vmatprep.subr.mxu0 0.0
        %940 = vmatpush1.msra.mxu0 0.0
        %941 = vmatprep.subr.mxu0 0.0
        %942 = vmatpush1.msra.mxu0 0.0
        %943 = vmatprep.subr.mxu0 0.0
        %944 = vmatpush1.msra.mxu0 0.0
        %945 = vmatprep.subr.mxu0 0.0
        %946 = vmatpush1.msra.mxu0 0.0
        %947 = vmatprep.subr.mxu0 0.0
        %948 = vmatpush1.msra.mxu0 0.0
        %949 = vmatprep.subr.mxu0 0.0
        %950 = vmatpush1.msra.mxu0 0.0
        %951 = vmatprep.subr.mxu0 0.0
        %952 = vmatpush1.msra.mxu0 0.0
        %953 = vmatprep.subr.mxu0 0.0
        %954 = vmatpush1.msra.mxu0 0.0
        %955 = vmatprep.subr.mxu0 0.0
        %956 = vmatpush1.msra.mxu0 0.0
        %957 = vmatprep.subr.mxu0 0.0
        %958 = vmatpush1.msra.mxu0 0.0
        %959 = vmatprep.subr.mxu0 0.0
        %960 = vmatpush1.msra.mxu0 0.0
        %961 = vmatprep.subr.mxu0 0.0
        %962 = vmatpush1.msra.mxu0 0.0
        %963 = vmatprep.subr.mxu0 0.0
        %964 = vmatpush1.msra.mxu0 0.0
        %965 = vmatprep.subr.mxu0 0.0
        %966 = vmatpush1.msra.mxu0 0.0
        %967 = vmatprep.subr.mxu0 0.0
        %968 = vmatpush1.msra.mxu0 %v842
        %969 = vmatprep.subr.mxu0 0.0
        %970 = vmatpush2.msra.mxu0 0.0
        %971 = vmatprep.subr.mxu0 0.0
        %972 = vmatpush2.msra.mxu0 0.0
        %973 = vmatprep.subr.mxu0 0.0
        %974 = vmatpush2.msra.mxu0 0.0
        %975 = vmatprep.subr.mxu0 0.0
        %976 = vmatpush2.msra.mxu0 0.0
        %977 = vmatprep.subr.mxu0 0.0
        %978 = vmatpush2.msra.mxu0 0.0
        %979 = vmatprep.subr.mxu0 0.0
        %980 = vmatpush2.msra.mxu0 0.0
        %981 = vmatprep.subr.mxu0 0.0
        %982 = vmatpush2.msra.mxu0 0.0
        %983 = vmatprep.subr.mxu0 0.0
        %984 = vmatpush2.msra.mxu0 0.0
        %985 = vmatprep.subr.mxu0 0.0
        %986 = vmatpush2.msra.mxu0 0.0
        %987 = vmatprep.subr.mxu0 0.0
        %988 = vmatpush2.msra.mxu0 0.0
        %989 = vmatprep.subr.mxu0 0.0
        %990 = vmatpush2.msra.mxu0 0.0
        %991 = vmatprep.subr.mxu0 0.0
        %992 = vmatpush2.msra.mxu0 0.0
        %993 = vmatprep.subr.mxu0 0.0
        %994 = vmatpush2.msra.mxu0 0.0
        %995 = vmatprep.subr.mxu0 0.0
        %996 = vmatpush2.msra.mxu0 0.0
        %997 = vmatprep.subr.mxu0 0.0
        %998 = vmatpush2.msra.mxu0 0.0
        %999 = vmatprep.subr.mxu0 0.0
        %1000 = vmatpush2.msra.mxu0 0.0
        %1001 = vmatprep.mubr.f32.mxu0 0.0
        %1002 = vmatmul.mubr.f32.gmra.mxu0 %v935
        %v1003 = vpop.f32.mrf.mxu0
        %v1004 = vadd.f32 0.0, %v1003
        %v1005 = vpop.f32.mrf.mxu0
        %1006 = vdwg.mxu0
        %v1007 = vld [vmem:[#allocation13] sm:$0xff]
        %1008 = vrot.lane.b32.xlu0 %v676, 120
        %v1009 = vpop.permute.xlu0 %1008
        %1010 = vrot.lane.b32.xlu0 %v758, 120
        %v1011 = vpop.permute.xlu0 %1010
        %v1012 = vsel %vm845, %v1009, 0
        %v1014 = vsel %vm845, %v1011, 0
        %1016 = vmatprep.subr.mxu0 0.0
        %1017 = vmatpush1.xpose.msra.mxu0 0.0
        %1018 = vmatprep.subr.mxu0 0.0
        %1019 = vmatpush1.xpose.msra.mxu0 0.0
        %1020 = vmatprep.subr.mxu0 0.0
        %1021 = vmatpush1.xpose.msra.mxu0 0.0
        %1022 = vmatprep.subr.mxu0 0.0
        %1023 = vmatpush1.xpose.msra.mxu0 0.0
        %1024 = vmatprep.subr.mxu0 0.0
        %1025 = vmatpush1.xpose.msra.mxu0 0.0
        %1026 = vmatprep.subr.mxu0 0.0
        %1027 = vmatpush1.xpose.msra.mxu0 0.0
        %1028 = vmatprep.subr.mxu0 0.0
        %1029 = vmatpush1.xpose.msra.mxu0 0.0
        %1030 = vmatprep.subr.mxu0 0.0
        %1031 = vmatpush1.xpose.msra.mxu0 0.0
        %1032 = vmatprep.subr.mxu0 0.0
        %1033 = vmatpush1.xpose.msra.mxu0 0.0
        %1034 = vmatprep.subr.mxu0 0.0
        %1035 = vmatpush1.xpose.msra.mxu0 0.0
        %1036 = vmatprep.subr.mxu0 0.0
        %1037 = vmatpush1.xpose.msra.mxu0 0.0
        %1038 = vmatprep.subr.mxu0 0.0
        %1039 = vmatpush1.xpose.msra.mxu0 0.0
        %1040 = vmatprep.subr.mxu0 0.0
        %1041 = vmatpush1.xpose.msra.mxu0 0.0
        %1042 = vmatprep.subr.mxu0 0.0
        %1043 = vmatpush1.xpose.msra.mxu0 0.0
        %1044 = vmatprep.subr.mxu0 0.0
        %1045 = vmatpush1.xpose.msra.mxu0 0.0
        %1046 = vmatprep.subr.mxu0 0.0
        %1047 = vmatpush1.xpose.msra.mxu0 %v1014
        %1048 = vmatprep.subr.mxu0 0.0
        %1049 = vmatpush2.xpose.msra.mxu0 0.0
        %1050 = vmatprep.subr.mxu0 0.0
        %1051 = vmatpush2.xpose.msra.mxu0 0.0
        %1052 = vmatprep.subr.mxu0 0.0
        %1053 = vmatpush2.xpose.msra.mxu0 0.0
        %1054 = vmatprep.subr.mxu0 0.0
        %1055 = vmatpush2.xpose.msra.mxu0 0.0
        %1056 = vmatprep.subr.mxu0 0.0
        %1057 = vmatpush2.xpose.msra.mxu0 0.0
        %1058 = vmatprep.subr.mxu0 0.0
        %1059 = vmatpush2.xpose.msra.mxu0 0.0
        %1060 = vmatprep.subr.mxu0 0.0
        %1061 = vmatpush2.xpose.msra.mxu0 0.0
        %1062 = vmatprep.subr.mxu0 0.0
        %1063 = vmatpush2.xpose.msra.mxu0 0.0
        %1064 = vmatprep.subr.mxu0 0.0
        %1065 = vmatpush2.xpose.msra.mxu0 0.0
        %1066 = vmatprep.subr.mxu0 0.0
        %1067 = vmatpush2.xpose.msra.mxu0 0.0
        %1068 = vmatprep.subr.mxu0 0.0
        %1069 = vmatpush2.xpose.msra.mxu0 0.0
        %1070 = vmatprep.subr.mxu0 0.0
        %1071 = vmatpush2.xpose.msra.mxu0 0.0
        %1072 = vmatprep.subr.mxu0 0.0
        %1073 = vmatpush2.xpose.msra.mxu0 0.0
        %1074 = vmatprep.subr.mxu0 0.0
        %1075 = vmatpush2.xpose.msra.mxu0 0.0
        %1076 = vmatprep.subr.mxu0 0.0
        %1077 = vmatpush2.xpose.msra.mxu0 0.0
        %1078 = vmatprep.subr.mxu0 0.0
        %1079 = vmatpush2.xpose.msra.mxu0 0.0
        %1080 = vmatprep.mubr.f32.mxu0 0.0
        %1081 = vmatmul.mubr.f32.gmra.mxu0 %v1012
        %v1082 = vpop.f32.mrf.mxu0
        %v1083 = vadd.f32 0.0, %v1082
        %v1084 = vpop.f32.mrf.mxu0
        %1085 = vdwg.mxu0
        %v1086 = vsel %vm845, %v1083, -inf
        %1087 = vmax.xlane.f32.xlu0 %v1086
        %v1088 = vpop.xlane.xlu0 %1087
        %v1089 = vsub.f32 %v1083, %v1088
        %v1090 = vmul.f32 %v1089, 1.442695
        %v1091 = vpow.pop %v1090
        %v1092 = vsel %vm845, %v1091, 0.0
        %1093 = vadd.xlane.f32.xlu0 %v1092
        %v1094 = vpop.xlane.xlu0 %1093
        %v1095 = vrcp.pop %v1094
        %v1096 = vmul.f32 %v1091, %v1095
        %s1097 = scalar_lea.vmem %s587, 8 [#allocation15]
        %1098 = vst.msk [vmem:[%s1097] sm:$0xff] %vm845, %v1096
        %1100 = vrot.lane.b32.xlu0 %v842, 120
        %v1101 = vpop.permute.xlu0 %1100
        %v1104 = vsel %vm845, %v1096, 0
        %1106 = vmatprep.subr.mxu0 0.0
        %1107 = vmatpush1.msra.mxu0 0.0
        %1108 = vmatprep.subr.mxu0 0.0
        %1109 = vmatpush1.msra.mxu0 0.0
        %1110 = vmatprep.subr.mxu0 0.0
        %1111 = vmatpush1.msra.mxu0 0.0
        %1112 = vmatprep.subr.mxu0 0.0
        %1113 = vmatpush1.msra.mxu0 0.0
        %1114 = vmatprep.subr.mxu0 0.0
        %1115 = vmatpush1.msra.mxu0 0.0
        %1116 = vmatprep.subr.mxu0 0.0
        %1117 = vmatpush1.msra.mxu0 0.0
        %1118 = vmatprep.subr.mxu0 0.0
        %1119 = vmatpush1.msra.mxu0 0.0
        %1120 = vmatprep.subr.mxu0 0.0
        %1121 = vmatpush1.msra.mxu0 0.0
        %1122 = vmatprep.subr.mxu0 0.0
        %1123 = vmatpush1.msra.mxu0 0.0
        %1124 = vmatprep.subr.mxu0 0.0
        %1125 = vmatpush1.msra.mxu0 0.0
        %1126 = vmatprep.subr.mxu0 0.0
        %1127 = vmatpush1.msra.mxu0 0.0
        %1128 = vmatprep.subr.mxu0 0.0
        %1129 = vmatpush1.msra.mxu0 0.0
        %1130 = vmatprep.subr.mxu0 0.0
        %1131 = vmatpush1.msra.mxu0 0.0
        %1132 = vmatprep.subr.mxu0 0.0
        %1133 = vmatpush1.msra.mxu0 0.0
        %1134 = vmatprep.subr.mxu0 0.0
        %1135 = vmatpush1.msra.mxu0 0.0
        %1136 = vmatprep.subr.mxu0 0.0
        %1137 = vmatpush1.msra.mxu0 %v1101
        %1138 = vmatprep.subr.mxu0 0.0
        %1139 = vmatpush2.msra.mxu0 0.0
        %1140 = vmatprep.subr.mxu0 0.0
        %1141 = vmatpush2.msra.mxu0 0.0
        %1142 = vmatprep.subr.mxu0 0.0
        %1143 = vmatpush2.msra.mxu0 0.0
        %1144 = vmatprep.subr.mxu0 0.0
        %1145 = vmatpush2.msra.mxu0 0.0
        %1146 = vmatprep.subr.mxu0 0.0
        %1147 = vmatpush2.msra.mxu0 0.0
        %1148 = vmatprep.subr.mxu0 0.0
        %1149 = vmatpush2.msra.mxu0 0.0
        %1150 = vmatprep.subr.mxu0 0.0
        %1151 = vmatpush2.msra.mxu0 0.0
        %1152 = vmatprep.subr.mxu0 0.0
        %1153 = vmatpush2.msra.mxu0 0.0
        %1154 = vmatprep.subr.mxu0 0.0
        %1155 = vmatpush2.msra.mxu0 0.0
        %1156 = vmatprep.subr.mxu0 0.0
        %1157 = vmatpush2.msra.mxu0 0.0
        %1158 = vmatprep.subr.mxu0 0.0
        %1159 = vmatpush2.msra.mxu0 0.0
        %1160 = vmatprep.subr.mxu0 0.0
        %1161 = vmatpush2.msra.mxu0 0.0
        %1162 = vmatprep.subr.mxu0 0.0
        %1163 = vmatpush2.msra.mxu0 0.0
        %1164 = vmatprep.subr.mxu0 0.0
        %1165 = vmatpush2.msra.mxu0 0.0
        %1166 = vmatprep.subr.mxu0 0.0
        %1167 = vmatpush2.msra.mxu0 0.0
        %1168 = vmatprep.subr.mxu0 0.0
        %1169 = vmatpush2.msra.mxu0 0.0
        %1170 = vmatprep.mubr.f32.mxu0 0.0
        %1171 = vmatmul.mubr.f32.gmra.mxu0 %v1104
        %v1172 = vpop.f32.mrf.mxu0
        %v1173 = vadd.f32 0.0, %v1172
        %v1174 = vpop.f32.mrf.mxu0
        %1175 = vdwg.mxu0
        %v1176 = vld [vmem:[#allocation13 + $0x8] sm:$0xff]
        %v1178 = vsel %vm845, %v1173, 0
        %1180 = vmatprep.subr.mxu0 0.0
        %1181 = vmatpush1.msra.mxu0 0.0
        %1182 = vmatprep.subr.mxu0 0.0
        %1183 = vmatpush1.msra.mxu0 0.0
        %1184 = vmatprep.subr.mxu0 0.0
        %1185 = vmatpush1.msra.mxu0 0.0
        %1186 = vmatprep.subr.mxu0 0.0
        %1187 = vmatpush1.msra.mxu0 0.0
        %1188 = vmatprep.subr.mxu0 0.0
        %1189 = vmatpush1.msra.mxu0 0.0
        %1190 = vmatprep.subr.mxu0 0.0
        %1191 = vmatpush1.msra.mxu0 0.0
        %1192 = vmatprep.subr.mxu0 0.0
        %1193 = vmatpush1.msra.mxu0 0.0
        %1194 = vmatprep.subr.mxu0 0.0
        %1195 = vmatpush1.msra.mxu0 0.0
        %1196 = vmatprep.subr.mxu0 0.0
        %1197 = vmatpush1.msra.mxu0 0.0
        %1198 = vmatprep.subr.mxu0 0.0
        %1199 = vmatpush1.msra.mxu0 0.0
        %1200 = vmatprep.subr.mxu0 0.0
        %1201 = vmatpush1.msra.mxu0 0.0
        %1202 = vmatprep.subr.mxu0 0.0
        %1203 = vmatpush1.msra.mxu0 0.0
        %1204 = vmatprep.subr.mxu0 0.0
        %1205 = vmatpush1.msra.mxu0 0.0
        %1206 = vmatprep.subr.mxu0 0.0
        %1207 = vmatpush1.msra.mxu0 0.0
        %1208 = vmatprep.subr.mxu0 0.0
        %1209 = vmatpush1.msra.mxu0 0.0
        %1210 = vmatprep.subr.mxu0 0.0
        %1211 = vmatpush1.msra.mxu0 %v1176
        %1212 = vmatprep.subr.mxu0 0.0
        %1213 = vmatpush2.msra.mxu0 0.0
        %1214 = vmatprep.subr.mxu0 0.0
        %1215 = vmatpush2.msra.mxu0 0.0
        %1216 = vmatprep.subr.mxu0 0.0
        %1217 = vmatpush2.msra.mxu0 0.0
        %1218 = vmatprep.subr.mxu0 0.0
        %1219 = vmatpush2.msra.mxu0 0.0
        %1220 = vmatprep.subr.mxu0 0.0
        %1221 = vmatpush2.msra.mxu0 0.0
        %1222 = vmatprep.subr.mxu0 0.0
        %1223 = vmatpush2.msra.mxu0 0.0
        %1224 = vmatprep.subr.mxu0 0.0
        %1225 = vmatpush2.msra.mxu0 0.0
        %1226 = vmatprep.subr.mxu0 0.0
        %1227 = vmatpush2.msra.mxu0 0.0
        %1228 = vmatprep.subr.mxu0 0.0
        %1229 = vmatpush2.msra.mxu0 0.0
        %1230 = vmatprep.subr.mxu0 0.0
        %1231 = vmatpush2.msra.mxu0 0.0
        %1232 = vmatprep.subr.mxu0 0.0
        %1233 = vmatpush2.msra.mxu0 0.0
        %1234 = vmatprep.subr.mxu0 0.0
        %1235 = vmatpush2.msra.mxu0 0.0
        %1236 = vmatprep.subr.mxu0 0.0
        %1237 = vmatpush2.msra.mxu0 0.0
        %1238 = vmatprep.subr.mxu0 0.0
        %1239 = vmatpush2.msra.mxu0 0.0
        %1240 = vmatprep.subr.mxu0 0.0
        %1241 = vmatpush2.msra.mxu0 0.0
        %1242 = vmatprep.subr.mxu0 0.0
        %1243 = vmatpush2.msra.mxu0 0.0
        %1244 = vmatprep.mubr.f32.mxu0 0.0
        %1245 = vmatmul.mubr.f32.gmra.mxu0 %v1178
        %v1246 = vpop.f32.mrf.mxu0
        %v1247 = vadd.f32 0.0, %v1246
        %v1248 = vpop.f32.mrf.mxu0
        %1249 = vdwg.mxu0
        %v1251 = vsel %vm845, %v1004, 0
        %1253 = vmatprep.subr.mxu0 0.0
        %1254 = vmatpush1.msra.mxu0 0.0
        %1255 = vmatprep.subr.mxu0 0.0
        %1256 = vmatpush1.msra.mxu0 0.0
        %1257 = vmatprep.subr.mxu0 0.0
        %1258 = vmatpush1.msra.mxu0 0.0
        %1259 = vmatprep.subr.mxu0 0.0
        %1260 = vmatpush1.msra.mxu0 0.0
        %1261 = vmatprep.subr.mxu0 0.0
        %1262 = vmatpush1.msra.mxu0 0.0
        %1263 = vmatprep.subr.mxu0 0.0
        %1264 = vmatpush1.msra.mxu0 0.0
        %1265 = vmatprep.subr.mxu0 0.0
        %1266 = vmatpush1.msra.mxu0 0.0
        %1267 = vmatprep.subr.mxu0 0.0
        %1268 = vmatpush1.msra.mxu0 0.0
        %1269 = vmatprep.subr.mxu0 0.0
        %1270 = vmatpush1.msra.mxu0 0.0
        %1271 = vmatprep.subr.mxu0 0.0
        %1272 = vmatpush1.msra.mxu0 0.0
        %1273 = vmatprep.subr.mxu0 0.0
        %1274 = vmatpush1.msra.mxu0 0.0
        %1275 = vmatprep.subr.mxu0 0.0
        %1276 = vmatpush1.msra.mxu0 0.0
        %1277 = vmatprep.subr.mxu0 0.0
        %1278 = vmatpush1.msra.mxu0 0.0
        %1279 = vmatprep.subr.mxu0 0.0
        %1280 = vmatpush1.msra.mxu0 0.0
        %1281 = vmatprep.subr.mxu0 0.0
        %1282 = vmatpush1.msra.mxu0 0.0
        %1283 = vmatprep.subr.mxu0 0.0
        %1284 = vmatpush1.msra.mxu0 %v1007
        %1285 = vmatprep.subr.mxu0 0.0
        %1286 = vmatpush2.msra.mxu0 0.0
        %1287 = vmatprep.subr.mxu0 0.0
        %1288 = vmatpush2.msra.mxu0 0.0
        %1289 = vmatprep.subr.mxu0 0.0
        %1290 = vmatpush2.msra.mxu0 0.0
        %1291 = vmatprep.subr.mxu0 0.0
        %1292 = vmatpush2.msra.mxu0 0.0
        %1293 = vmatprep.subr.mxu0 0.0
        %1294 = vmatpush2.msra.mxu0 0.0
        %1295 = vmatprep.subr.mxu0 0.0
        %1296 = vmatpush2.msra.mxu0 0.0
        %1297 = vmatprep.subr.mxu0 0.0
        %1298 = vmatpush2.msra.mxu0 0.0
        %1299 = vmatprep.subr.mxu0 0.0
        %1300 = vmatpush2.msra.mxu0 0.0
        %1301 = vmatprep.subr.mxu0 0.0
        %1302 = vmatpush2.msra.mxu0 0.0
        %1303 = vmatprep.subr.mxu0 0.0
        %1304 = vmatpush2.msra.mxu0 0.0
        %1305 = vmatprep.subr.mxu0 0.0
        %1306 = vmatpush2.msra.mxu0 0.0
        %1307 = vmatprep.subr.mxu0 0.0
        %1308 = vmatpush2.msra.mxu0 0.0
        %1309 = vmatprep.subr.mxu0 0.0
        %1310 = vmatpush2.msra.mxu0 0.0
        %1311 = vmatprep.subr.mxu0 0.0
        %1312 = vmatpush2.msra.mxu0 0.0
        %1313 = vmatprep.subr.mxu0 0.0
        %1314 = vmatpush2.msra.mxu0 0.0
        %1315 = vmatprep.subr.mxu0 0.0
        %1316 = vmatpush2.msra.mxu0 0.0
        %1317 = vmatprep.mubr.f32.mxu0 0.0
        %1318 = vmatmul.mubr.f32.gmra.mxu0 %v1251
        %v1319 = vpop.f32.mrf.mxu0
        %v1320 = vadd.f32 %v1247, %v1319
        %v1321 = vpop.f32.mrf.mxu0
        %1322 = vdwg.mxu0
        %1323 = vrot.lane.b32.xlu0 %v676, 112
        %v1324 = vpop.permute.xlu0 %1323
        %1325 = vrot.lane.b32.xlu0 %v758, 112
        %v1326 = vpop.permute.xlu0 %1325
        %v1327 = vsel %vm845, %v1324, 0
        %v1329 = vsel %vm845, %v1326, 0
        %1331 = vmatprep.subr.mxu0 0.0
        %1332 = vmatpush1.xpose.msra.mxu0 0.0
        %1333 = vmatprep.subr.mxu0 0.0
        %1334 = vmatpush1.xpose.msra.mxu0 0.0
        %1335 = vmatprep.subr.mxu0 0.0
        %1336 = vmatpush1.xpose.msra.mxu0 0.0
        %1337 = vmatprep.subr.mxu0 0.0
        %1338 = vmatpush1.xpose.msra.mxu0 0.0
        %1339 = vmatprep.subr.mxu0 0.0
        %1340 = vmatpush1.xpose.msra.mxu0 0.0
        %1341 = vmatprep.subr.mxu0 0.0
        %1342 = vmatpush1.xpose.msra.mxu0 0.0
        %1343 = vmatprep.subr.mxu0 0.0
        %1344 = vmatpush1.xpose.msra.mxu0 0.0
        %1345 = vmatprep.subr.mxu0 0.0
        %1346 = vmatpush1.xpose.msra.mxu0 0.0
        %1347 = vmatprep.subr.mxu0 0.0
        %1348 = vmatpush1.xpose.msra.mxu0 0.0
        %1349 = vmatprep.subr.mxu0 0.0
        %1350 = vmatpush1.xpose.msra.mxu0 0.0
        %1351 = vmatprep.subr.mxu0 0.0
        %1352 = vmatpush1.xpose.msra.mxu0 0.0
        %1353 = vmatprep.subr.mxu0 0.0
        %1354 = vmatpush1.xpose.msra.mxu0 0.0
        %1355 = vmatprep.subr.mxu0 0.0
        %1356 = vmatpush1.xpose.msra.mxu0 0.0
        %1357 = vmatprep.subr.mxu0 0.0
        %1358 = vmatpush1.xpose.msra.mxu0 0.0
        %1359 = vmatprep.subr.mxu0 0.0
        %1360 = vmatpush1.xpose.msra.mxu0 0.0
        %1361 = vmatprep.subr.mxu0 0.0
        %1362 = vmatpush1.xpose.msra.mxu0 %v1329
        %1363 = vmatprep.subr.mxu0 0.0
        %1364 = vmatpush2.xpose.msra.mxu0 0.0
        %1365 = vmatprep.subr.mxu0 0.0
        %1366 = vmatpush2.xpose.msra.mxu0 0.0
        %1367 = vmatprep.subr.mxu0 0.0
        %1368 = vmatpush2.xpose.msra.mxu0 0.0
        %1369 = vmatprep.subr.mxu0 0.0
        %1370 = vmatpush2.xpose.msra.mxu0 0.0
        %1371 = vmatprep.subr.mxu0 0.0
        %1372 = vmatpush2.xpose.msra.mxu0 0.0
        %1373 = vmatprep.subr.mxu0 0.0
        %1374 = vmatpush2.xpose.msra.mxu0 0.0
        %1375 = vmatprep.subr.mxu0 0.0
        %1376 = vmatpush2.xpose.msra.mxu0 0.0
        %1377 = vmatprep.subr.mxu0 0.0
        %1378 = vmatpush2.xpose.msra.mxu0 0.0
        %1379 = vmatprep.subr.mxu0 0.0
        %1380 = vmatpush2.xpose.msra.mxu0 0.0
        %1381 = vmatprep.subr.mxu0 0.0
        %1382 = vmatpush2.xpose.msra.mxu0 0.0
        %1383 = vmatprep.subr.mxu0 0.0
        %1384 = vmatpush2.xpose.msra.mxu0 0.0
        %1385 = vmatprep.subr.mxu0 0.0
        %1386 = vmatpush2.xpose.msra.mxu0 0.0
        %1387 = vmatprep.subr.mxu0 0.0
        %1388 = vmatpush2.xpose.msra.mxu0 0.0
        %1389 = vmatprep.subr.mxu0 0.0
        %1390 = vmatpush2.xpose.msra.mxu0 0.0
        %1391 = vmatprep.subr.mxu0 0.0
        %1392 = vmatpush2.xpose.msra.mxu0 0.0
        %1393 = vmatprep.subr.mxu0 0.0
        %1394 = vmatpush2.xpose.msra.mxu0 0.0
        %1395 = vmatprep.mubr.f32.mxu0 0.0
        %1396 = vmatmul.mubr.f32.gmra.mxu0 %v1327
        %v1397 = vpop.f32.mrf.mxu0
        %v1398 = vadd.f32 0.0, %v1397
        %v1399 = vpop.f32.mrf.mxu0
        %1400 = vdwg.mxu0
        %v1401 = vsel %vm845, %v1398, -inf
        %1402 = vmax.xlane.f32.xlu0 %v1401
        %v1403 = vpop.xlane.xlu0 %1402
        %v1404 = vsub.f32 %v1398, %v1403
        %v1405 = vmul.f32 %v1404, 1.442695
        %v1406 = vpow.pop %v1405
        %v1407 = vsel %vm845, %v1406, 0.0
        %1408 = vadd.xlane.f32.xlu0 %v1407
        %v1409 = vpop.xlane.xlu0 %1408
        %v1410 = vrcp.pop %v1409
        %v1411 = vmul.f32 %v1406, %v1410
        %s1412 = scalar_lea.vmem %s587, 16 [#allocation15]
        %1413 = vst.msk [vmem:[%s1412] sm:$0xff] %vm845, %v1411
        %1414 = vrot.lane.b32.xlu0 %v842, 112
        %v1415 = vpop.permute.xlu0 %1414
        %v1418 = vsel %vm845, %v1411, 0
        %1420 = vmatprep.subr.mxu0 0.0
        %1421 = vmatpush1.msra.mxu0 0.0
        %1422 = vmatprep.subr.mxu0 0.0
        %1423 = vmatpush1.msra.mxu0 0.0
        %1424 = vmatprep.subr.mxu0 0.0
        %1425 = vmatpush1.msra.mxu0 0.0
        %1426 = vmatprep.subr.mxu0 0.0
        %1427 = vmatpush1.msra.mxu0 0.0
        %1428 = vmatprep.subr.mxu0 0.0
        %1429 = vmatpush1.msra.mxu0 0.0
        %1430 = vmatprep.subr.mxu0 0.0
        %1431 = vmatpush1.msra.mxu0 0.0
        %1432 = vmatprep.subr.mxu0 0.0
        %1433 = vmatpush1.msra.mxu0 0.0
        %1434 = vmatprep.subr.mxu0 0.0
        %1435 = vmatpush1.msra.mxu0 0.0
        %1436 = vmatprep.subr.mxu0 0.0
        %1437 = vmatpush1.msra.mxu0 0.0
        %1438 = vmatprep.subr.mxu0 0.0
        %1439 = vmatpush1.msra.mxu0 0.0
        %1440 = vmatprep.subr.mxu0 0.0
        %1441 = vmatpush1.msra.mxu0 0.0
        %1442 = vmatprep.subr.mxu0 0.0
        %1443 = vmatpush1.msra.mxu0 0.0
        %1444 = vmatprep.subr.mxu0 0.0
        %1445 = vmatpush1.msra.mxu0 0.0
        %1446 = vmatprep.subr.mxu0 0.0
        %1447 = vmatpush1.msra.mxu0 0.0
        %1448 = vmatprep.subr.mxu0 0.0
        %1449 = vmatpush1.msra.mxu0 0.0
        %1450 = vmatprep.subr.mxu0 0.0
        %1451 = vmatpush1.msra.mxu0 %v1415
        %1452 = vmatprep.subr.mxu0 0.0
        %1453 = vmatpush2.msra.mxu0 0.0
        %1454 = vmatprep.subr.mxu0 0.0
        %1455 = vmatpush2.msra.mxu0 0.0
        %1456 = vmatprep.subr.mxu0 0.0
        %1457 = vmatpush2.msra.mxu0 0.0
        %1458 = vmatprep.subr.mxu0 0.0
        %1459 = vmatpush2.msra.mxu0 0.0
        %1460 = vmatprep.subr.mxu0 0.0
        %1461 = vmatpush2.msra.mxu0 0.0
        %1462 = vmatprep.subr.mxu0 0.0
        %1463 = vmatpush2.msra.mxu0 0.0
        %1464 = vmatprep.subr.mxu0 0.0
        %1465 = vmatpush2.msra.mxu0 0.0
        %1466 = vmatprep.subr.mxu0 0.0
        %1467 = vmatpush2.msra.mxu0 0.0
        %1468 = vmatprep.subr.mxu0 0.0
        %1469 = vmatpush2.msra.mxu0 0.0
        %1470 = vmatprep.subr.mxu0 0.0
        %1471 = vmatpush2.msra.mxu0 0.0
        %1472 = vmatprep.subr.mxu0 0.0
        %1473 = vmatpush2.msra.mxu0 0.0
        %1474 = vmatprep.subr.mxu0 0.0
        %1475 = vmatpush2.msra.mxu0 0.0
        %1476 = vmatprep.subr.mxu0 0.0
        %1477 = vmatpush2.msra.mxu0 0.0
        %1478 = vmatprep.subr.mxu0 0.0
        %1479 = vmatpush2.msra.mxu0 0.0
        %1480 = vmatprep.subr.mxu0 0.0
        %1481 = vmatpush2.msra.mxu0 0.0
        %1482 = vmatprep.subr.mxu0 0.0
        %1483 = vmatpush2.msra.mxu0 0.0
        %1484 = vmatprep.mubr.f32.mxu0 0.0
        %1485 = vmatmul.mubr.f32.gmra.mxu0 %v1418
        %v1486 = vpop.f32.mrf.mxu0
        %v1487 = vadd.f32 0.0, %v1486
        %v1488 = vpop.f32.mrf.mxu0
        %1489 = vdwg.mxu0
        %v1490 = vld [vmem:[#allocation13 + $0x10] sm:$0xff]
        %v1492 = vsel %vm845, %v1487, 0
        %1494 = vmatprep.subr.mxu0 0.0
        %1495 = vmatpush1.msra.mxu0 0.0
        %1496 = vmatprep.subr.mxu0 0.0
        %1497 = vmatpush1.msra.mxu0 0.0
        %1498 = vmatprep.subr.mxu0 0.0
        %1499 = vmatpush1.msra.mxu0 0.0
        %1500 = vmatprep.subr.mxu0 0.0
        %1501 = vmatpush1.msra.mxu0 0.0
        %1502 = vmatprep.subr.mxu0 0.0
        %1503 = vmatpush1.msra.mxu0 0.0
        %1504 = vmatprep.subr.mxu0 0.0
        %1505 = vmatpush1.msra.mxu0 0.0
        %1506 = vmatprep.subr.mxu0 0.0
        %1507 = vmatpush1.msra.mxu0 0.0
        %1508 = vmatprep.subr.mxu0 0.0
        %1509 = vmatpush1.msra.mxu0 0.0
        %1510 = vmatprep.subr.mxu0 0.0
        %1511 = vmatpush1.msra.mxu0 0.0
        %1512 = vmatprep.subr.mxu0 0.0
        %1513 = vmatpush1.msra.mxu0 0.0
        %1514 = vmatprep.subr.mxu0 0.0
        %1515 = vmatpush1.msra.mxu0 0.0
        %1516 = vmatprep.subr.mxu0 0.0
        %1517 = vmatpush1.msra.mxu0 0.0
        %1518 = vmatprep.subr.mxu0 0.0
        %1519 = vmatpush1.msra.mxu0 0.0
        %1520 = vmatprep.subr.mxu0 0.0
        %1521 = vmatpush1.msra.mxu0 0.0
        %1522 = vmatprep.subr.mxu0 0.0
        %1523 = vmatpush1.msra.mxu0 0.0
        %1524 = vmatprep.subr.mxu0 0.0
        %1525 = vmatpush1.msra.mxu0 %v1490
        %1526 = vmatprep.subr.mxu0 0.0
        %1527 = vmatpush2.msra.mxu0 0.0
        %1528 = vmatprep.subr.mxu0 0.0
        %1529 = vmatpush2.msra.mxu0 0.0
        %1530 = vmatprep.subr.mxu0 0.0
        %1531 = vmatpush2.msra.mxu0 0.0
        %1532 = vmatprep.subr.mxu0 0.0
        %1533 = vmatpush2.msra.mxu0 0.0
        %1534 = vmatprep.subr.mxu0 0.0
        %1535 = vmatpush2.msra.mxu0 0.0
        %1536 = vmatprep.subr.mxu0 0.0
        %1537 = vmatpush2.msra.mxu0 0.0
        %1538 = vmatprep.subr.mxu0 0.0
        %1539 = vmatpush2.msra.mxu0 0.0
        %1540 = vmatprep.subr.mxu0 0.0
        %1541 = vmatpush2.msra.mxu0 0.0
        %1542 = vmatprep.subr.mxu0 0.0
        %1543 = vmatpush2.msra.mxu0 0.0
        %1544 = vmatprep.subr.mxu0 0.0
        %1545 = vmatpush2.msra.mxu0 0.0
        %1546 = vmatprep.subr.mxu0 0.0
        %1547 = vmatpush2.msra.mxu0 0.0
        %1548 = vmatprep.subr.mxu0 0.0
        %1549 = vmatpush2.msra.mxu0 0.0
        %1550 = vmatprep.subr.mxu0 0.0
        %1551 = vmatpush2.msra.mxu0 0.0
        %1552 = vmatprep.subr.mxu0 0.0
        %1553 = vmatpush2.msra.mxu0 0.0
        %1554 = vmatprep.subr.mxu0 0.0
        %1555 = vmatpush2.msra.mxu0 0.0
        %1556 = vmatprep.subr.mxu0 0.0
        %1557 = vmatpush2.msra.mxu0 0.0
        %1558 = vmatprep.mubr.f32.mxu0 0.0
        %1559 = vmatmul.mubr.f32.gmra.mxu0 %v1492
        %v1560 = vpop.f32.mrf.mxu0
        %v1561 = vadd.f32 0.0, %v1560
        %v1562 = vpop.f32.mrf.mxu0
        %1563 = vdwg.mxu0
        %v1564 = vadd.f32 %v1320, %v1561
        %1565 = vrot.lane.b32.xlu0 %v676, 104
        %v1566 = vpop.permute.xlu0 %1565
        %1567 = vrot.lane.b32.xlu0 %v758, 104
        %v1568 = vpop.permute.xlu0 %1567
        %v1569 = vsel %vm845, %v1566, 0
        %v1571 = vsel %vm845, %v1568, 0
        %1573 = vmatprep.subr.mxu0 0.0
        %1574 = vmatpush1.xpose.msra.mxu0 0.0
        %1575 = vmatprep.subr.mxu0 0.0
        %1576 = vmatpush1.xpose.msra.mxu0 0.0
        %1577 = vmatprep.subr.mxu0 0.0
        %1578 = vmatpush1.xpose.msra.mxu0 0.0
        %1579 = vmatprep.subr.mxu0 0.0
        %1580 = vmatpush1.xpose.msra.mxu0 0.0
        %1581 = vmatprep.subr.mxu0 0.0
        %1582 = vmatpush1.xpose.msra.mxu0 0.0
        %1583 = vmatprep.subr.mxu0 0.0
        %1584 = vmatpush1.xpose.msra.mxu0 0.0
        %1585 = vmatprep.subr.mxu0 0.0
        %1586 = vmatpush1.xpose.msra.mxu0 0.0
        %1587 = vmatprep.subr.mxu0 0.0
        %1588 = vmatpush1.xpose.msra.mxu0 0.0
        %1589 = vmatprep.subr.mxu0 0.0
        %1590 = vmatpush1.xpose.msra.mxu0 0.0
        %1591 = vmatprep.subr.mxu0 0.0
        %1592 = vmatpush1.xpose.msra.mxu0 0.0
        %1593 = vmatprep.subr.mxu0 0.0
        %1594 = vmatpush1.xpose.msra.mxu0 0.0
        %1595 = vmatprep.subr.mxu0 0.0
        %1596 = vmatpush1.xpose.msra.mxu0 0.0
        %1597 = vmatprep.subr.mxu0 0.0
        %1598 = vmatpush1.xpose.msra.mxu0 0.0
        %1599 = vmatprep.subr.mxu0 0.0
        %1600 = vmatpush1.xpose.msra.mxu0 0.0
        %1601 = vmatprep.subr.mxu0 0.0
        %1602 = vmatpush1.xpose.msra.mxu0 0.0
        %1603 = vmatprep.subr.mxu0 0.0
        %1604 = vmatpush1.xpose.msra.mxu0 %v1571
        %1605 = vmatprep.subr.mxu0 0.0
        %1606 = vmatpush2.xpose.msra.mxu0 0.0
        %1607 = vmatprep.subr.mxu0 0.0
        %1608 = vmatpush2.xpose.msra.mxu0 0.0
        %1609 = vmatprep.subr.mxu0 0.0
        %1610 = vmatpush2.xpose.msra.mxu0 0.0
        %1611 = vmatprep.subr.mxu0 0.0
        %1612 = vmatpush2.xpose.msra.mxu0 0.0
        %1613 = vmatprep.subr.mxu0 0.0
        %1614 = vmatpush2.xpose.msra.mxu0 0.0
        %1615 = vmatprep.subr.mxu0 0.0
        %1616 = vmatpush2.xpose.msra.mxu0 0.0
        %1617 = vmatprep.subr.mxu0 0.0
        %1618 = vmatpush2.xpose.msra.mxu0 0.0
        %1619 = vmatprep.subr.mxu0 0.0
        %1620 = vmatpush2.xpose.msra.mxu0 0.0
        %1621 = vmatprep.subr.mxu0 0.0
        %1622 = vmatpush2.xpose.msra.mxu0 0.0
        %1623 = vmatprep.subr.mxu0 0.0
        %1624 = vmatpush2.xpose.msra.mxu0 0.0
        %1625 = vmatprep.subr.mxu0 0.0
        %1626 = vmatpush2.xpose.msra.mxu0 0.0
        %1627 = vmatprep.subr.mxu0 0.0
        %1628 = vmatpush2.xpose.msra.mxu0 0.0
        %1629 = vmatprep.subr.mxu0 0.0
        %1630 = vmatpush2.xpose.msra.mxu0 0.0
        %1631 = vmatprep.subr.mxu0 0.0
        %1632 = vmatpush2.xpose.msra.mxu0 0.0
        %1633 = vmatprep.subr.mxu0 0.0
        %1634 = vmatpush2.xpose.msra.mxu0 0.0
        %1635 = vmatprep.subr.mxu0 0.0
        %1636 = vmatpush2.xpose.msra.mxu0 0.0
        %1637 = vmatprep.mubr.f32.mxu0 0.0
        %1638 = vmatmul.mubr.f32.gmra.mxu0 %v1569
        %v1639 = vpop.f32.mrf.mxu0
        %v1640 = vadd.f32 0.0, %v1639
        %v1641 = vpop.f32.mrf.mxu0
        %1642 = vdwg.mxu0
        %v1643 = vsel %vm845, %v1640, -inf
        %1644 = vmax.xlane.f32.xlu0 %v1643
        %v1645 = vpop.xlane.xlu0 %1644
        %v1646 = vsub.f32 %v1640, %v1645
        %v1647 = vmul.f32 %v1646, 1.442695
        %v1648 = vpow.pop %v1647
        %v1649 = vsel %vm845, %v1648, 0.0
        %1650 = vadd.xlane.f32.xlu0 %v1649
        %v1651 = vpop.xlane.xlu0 %1650
        %v1652 = vrcp.pop %v1651
        %v1653 = vmul.f32 %v1648, %v1652
        %s1654 = scalar_lea.vmem %s587, 24 [#allocation15]
        %1655 = vst.msk [vmem:[%s1654] sm:$0xff] %vm845, %v1653
        %1656 = vrot.lane.b32.xlu0 %v842, 104
        %v1657 = vpop.permute.xlu0 %1656
        %v1660 = vsel %vm845, %v1653, 0
        %1662 = vmatprep.subr.mxu0 0.0
        %1663 = vmatpush1.msra.mxu0 0.0
        %1664 = vmatprep.subr.mxu0 0.0
        %1665 = vmatpush1.msra.mxu0 0.0
        %1666 = vmatprep.subr.mxu0 0.0
        %1667 = vmatpush1.msra.mxu0 0.0
        %1668 = vmatprep.subr.mxu0 0.0
        %1669 = vmatpush1.msra.mxu0 0.0
        %1670 = vmatprep.subr.mxu0 0.0
        %1671 = vmatpush1.msra.mxu0 0.0
        %1672 = vmatprep.subr.mxu0 0.0
        %1673 = vmatpush1.msra.mxu0 0.0
        %1674 = vmatprep.subr.mxu0 0.0
        %1675 = vmatpush1.msra.mxu0 0.0
        %1676 = vmatprep.subr.mxu0 0.0
        %1677 = vmatpush1.msra.mxu0 0.0
        %1678 = vmatprep.subr.mxu0 0.0
        %1679 = vmatpush1.msra.mxu0 0.0
        %1680 = vmatprep.subr.mxu0 0.0
        %1681 = vmatpush1.msra.mxu0 0.0
        %1682 = vmatprep.subr.mxu0 0.0
        %1683 = vmatpush1.msra.mxu0 0.0
        %1684 = vmatprep.subr.mxu0 0.0
        %1685 = vmatpush1.msra.mxu0 0.0
        %1686 = vmatprep.subr.mxu0 0.0
        %1687 = vmatpush1.msra.mxu0 0.0
        %1688 = vmatprep.subr.mxu0 0.0
        %1689 = vmatpush1.msra.mxu0 0.0
        %1690 = vmatprep.subr.mxu0 0.0
        %1691 = vmatpush1.msra.mxu0 0.0
        %1692 = vmatprep.subr.mxu0 0.0
        %1693 = vmatpush1.msra.mxu0 %v1657
        %1694 = vmatprep.subr.mxu0 0.0
        %1695 = vmatpush2.msra.mxu0 0.0
        %1696 = vmatprep.subr.mxu0 0.0
        %1697 = vmatpush2.msra.mxu0 0.0
        %1698 = vmatprep.subr.mxu0 0.0
        %1699 = vmatpush2.msra.mxu0 0.0
        %1700 = vmatprep.subr.mxu0 0.0
        %1701 = vmatpush2.msra.mxu0 0.0
        %1702 = vmatprep.subr.mxu0 0.0
        %1703 = vmatpush2.msra.mxu0 0.0
        %1704 = vmatprep.subr.mxu0 0.0
        %1705 = vmatpush2.msra.mxu0 0.0
        %1706 = vmatprep.subr.mxu0 0.0
        %1707 = vmatpush2.msra.mxu0 0.0
        %1708 = vmatprep.subr.mxu0 0.0
        %1709 = vmatpush2.msra.mxu0 0.0
        %1710 = vmatprep.subr.mxu0 0.0
        %1711 = vmatpush2.msra.mxu0 0.0
        %1712 = vmatprep.subr.mxu0 0.0
        %1713 = vmatpush2.msra.mxu0 0.0
        %1714 = vmatprep.subr.mxu0 0.0
        %1715 = vmatpush2.msra.mxu0 0.0
        %1716 = vmatprep.subr.mxu0 0.0
        %1717 = vmatpush2.msra.mxu0 0.0
        %1718 = vmatprep.subr.mxu0 0.0
        %1719 = vmatpush2.msra.mxu0 0.0
        %1720 = vmatprep.subr.mxu0 0.0
        %1721 = vmatpush2.msra.mxu0 0.0
        %1722 = vmatprep.subr.mxu0 0.0
        %1723 = vmatpush2.msra.mxu0 0.0
        %1724 = vmatprep.subr.mxu0 0.0
        %1725 = vmatpush2.msra.mxu0 0.0
        %1726 = vmatprep.mubr.f32.mxu0 0.0
        %1727 = vmatmul.mubr.f32.gmra.mxu0 %v1660
        %v1728 = vpop.f32.mrf.mxu0
        %v1729 = vadd.f32 0.0, %v1728
        %v1730 = vpop.f32.mrf.mxu0
        %1731 = vdwg.mxu0
        %v1732 = vld [vmem:[#allocation13 + $0x18] sm:$0xff]
        %v1734 = vsel %vm845, %v1729, 0
        %1736 = vmatprep.subr.mxu0 0.0
        %1737 = vmatpush1.msra.mxu0 0.0
        %1738 = vmatprep.subr.mxu0 0.0
        %1739 = vmatpush1.msra.mxu0 0.0
        %1740 = vmatprep.subr.mxu0 0.0
        %1741 = vmatpush1.msra.mxu0 0.0
        %1742 = vmatprep.subr.mxu0 0.0
        %1743 = vmatpush1.msra.mxu0 0.0
        %1744 = vmatprep.subr.mxu0 0.0
        %1745 = vmatpush1.msra.mxu0 0.0
        %1746 = vmatprep.subr.mxu0 0.0
        %1747 = vmatpush1.msra.mxu0 0.0
        %1748 = vmatprep.subr.mxu0 0.0
        %1749 = vmatpush1.msra.mxu0 0.0
        %1750 = vmatprep.subr.mxu0 0.0
        %1751 = vmatpush1.msra.mxu0 0.0
        %1752 = vmatprep.subr.mxu0 0.0
        %1753 = vmatpush1.msra.mxu0 0.0
        %1754 = vmatprep.subr.mxu0 0.0
        %1755 = vmatpush1.msra.mxu0 0.0
        %1756 = vmatprep.subr.mxu0 0.0
        %1757 = vmatpush1.msra.mxu0 0.0
        %1758 = vmatprep.subr.mxu0 0.0
        %1759 = vmatpush1.msra.mxu0 0.0
        %1760 = vmatprep.subr.mxu0 0.0
        %1761 = vmatpush1.msra.mxu0 0.0
        %1762 = vmatprep.subr.mxu0 0.0
        %1763 = vmatpush1.msra.mxu0 0.0
        %1764 = vmatprep.subr.mxu0 0.0
        %1765 = vmatpush1.msra.mxu0 0.0
        %1766 = vmatprep.subr.mxu0 0.0
        %1767 = vmatpush1.msra.mxu0 %v1732
        %1768 = vmatprep.subr.mxu0 0.0
        %1769 = vmatpush2.msra.mxu0 0.0
        %1770 = vmatprep.subr.mxu0 0.0
        %1771 = vmatpush2.msra.mxu0 0.0
        %1772 = vmatprep.subr.mxu0 0.0
        %1773 = vmatpush2.msra.mxu0 0.0
        %1774 = vmatprep.subr.mxu0 0.0
        %1775 = vmatpush2.msra.mxu0 0.0
        %1776 = vmatprep.subr.mxu0 0.0
        %1777 = vmatpush2.msra.mxu0 0.0
        %1778 = vmatprep.subr.mxu0 0.0
        %1779 = vmatpush2.msra.mxu0 0.0
        %1780 = vmatprep.subr.mxu0 0.0
        %1781 = vmatpush2.msra.mxu0 0.0
        %1782 = vmatprep.subr.mxu0 0.0
        %1783 = vmatpush2.msra.mxu0 0.0
        %1784 = vmatprep.subr.mxu0 0.0
        %1785 = vmatpush2.msra.mxu0 0.0
        %1786 = vmatprep.subr.mxu0 0.0
        %1787 = vmatpush2.msra.mxu0 0.0
        %1788 = vmatprep.subr.mxu0 0.0
        %1789 = vmatpush2.msra.mxu0 0.0
        %1790 = vmatprep.subr.mxu0 0.0
        %1791 = vmatpush2.msra.mxu0 0.0
        %1792 = vmatprep.subr.mxu0 0.0
        %1793 = vmatpush2.msra.mxu0 0.0
        %1794 = vmatprep.subr.mxu0 0.0
        %1795 = vmatpush2.msra.mxu0 0.0
        %1796 = vmatprep.subr.mxu0 0.0
        %1797 = vmatpush2.msra.mxu0 0.0
        %1798 = vmatprep.subr.mxu0 0.0
        %1799 = vmatpush2.msra.mxu0 0.0
        %1800 = vmatprep.mubr.f32.mxu0 0.0
        %1801 = vmatmul.mubr.f32.gmra.mxu0 %v1734
        %v1802 = vpop.f32.mrf.mxu0
        %v1803 = vadd.f32 0.0, %v1802
        %v1804 = vpop.f32.mrf.mxu0
        %1805 = vdwg.mxu0
        %v1806 = vadd.f32 %v1564, %v1803
        %v1807 = vld [vmem:[%s10] sm:$0x1]
        %v1809 = vlaneseq
        %v1810 = vshrl.u32 %v1809, 7
        %v1811 = vsub.s32 0, %v1810
        %v1812 = vrot.slane %v1807, %v1811
        %v1814 = vadd.f32 %v1806, %v1812
        %1815 = vst.msk [vmem:[%s580] sm:$0xff] %vm602, %v1814
        %s1816 = sand.u32 %s308, 1
        %s1817 = scalar_lea.sflag [#allocation4], %s1816
        %s1818 = sand.u32 %s308, 1
        %s1819 = smul.addr %s1818, 8
        %s1820 = scalar_lea.vmem [#allocation14], %s1819
        %s1821 = sand.u32 %s336, 1
        %s1822 = scalar_lea.sflag [#allocation16], %s1821
        %s1823 = sand.u32 %s336, 1
        %s1824 = smul.addr %s1823, 32
        %s1825 = scalar_lea.vmem [#allocation15], %s1824
        // Predicated region
        $region93: #{tpu_custom_call.1} parent=63 // pred_check
          %p1826 = pneg %p318
        $region94: #{tpu_custom_call.1} parent=63 // pred_check_branch
          %1828 = sbr.rel (%p1826) target = $region96
        $region95: #{tpu_custom_call.1} parent=63 // pred_region
          %s1830 = ssub.s32 128, 128
          %1831 = vsyncadd %s1817, %s1830
          %s1832 = sadd.s32 %s43, %s42
          %s1833 = smul.addr %s1832, 128
          %s1834 = scalar_lea.hbm %s11, %s1833
          %s1836 = sshll.u32 %s1820, 4
          %s1837 = int_to_ptr.vmem [resolvable:$true] %s1836
          %1839 = dma.vmem_to_hbm [thread:$0]  %s1837, 128, %s1834, %s1817
        $region96: #{tpu_custom_call.1} parent=63 // pred_fallthru
          _
        // Predicated region
        $region97: #{tpu_custom_call.1} parent=63 // pred_check
          %p1840 = pneg %p346
        $region98: #{tpu_custom_call.1} parent=63 // pred_check_branch
          %1842 = sbr.rel (%p1840) target = $region100
        $region99: #{tpu_custom_call.1} parent=63 // pred_region
          %s1844 = ssub.s32 512, 512
          %1845 = vsyncadd %s1822, %s1844
          %s1846 = smul.addr %s42, 4
          %s1847 = sadd.s32 %s43, %s1846
          %s1848 = smul.addr %s1847, 128
          %s1849 = scalar_lea.hbm %s12, %s1848
          %s1850 = sshll.u32 %s1825, 4
          %s1851 = int_to_ptr.vmem [resolvable:$true] %s1850
          %1856 = dma.vmem_to_hbm [thread:$0]  %s1851, 512, %s1849, %s1822, 128, 128, 8
        $region100: #{tpu_custom_call.1} parent=63 // pred_fallthru
          _
      $region64: #{tpu_custom_call.1} parent=5 // pred_fallthru
        _
      %p1857 = scmp.le.s32.totalorder 2, %s33
      // Predicated region
      $region101: #{tpu_custom_call.1} parent=5 // pred_check
        %p1858 = pneg %p1857
      $region102: #{tpu_custom_call.1} parent=5 // pred_check_branch
        %1860 = sbr.rel (%p1858) target = $region104
      $region103: #{tpu_custom_call.1} parent=5 // pred_region
        %s1861 = ssub.s32 %s33, 2
        // Predicated region
        $region105: #{tpu_custom_call.1} parent=103 // pred_check
          %p1862 = pneg %p324
        $region106: #{tpu_custom_call.1} parent=103 // pred_check_branch
          %1864 = sbr.rel (%p1862) target = $region108
        $region107: #{tpu_custom_call.1} parent=103 // pred_region
          %s1865 = sand.u32 %s309, 1
          %s1866 = scalar_lea.sflag [#allocation4], %s1865
          %s1867 = sand.u32 %s309, 1
          %s1868 = smul.addr %s1867, 8
          %s1869 = scalar_lea.vmem [#allocation14], %s1868
          %1870 = dma.done %s1866, 128
        $region108: #{tpu_custom_call.1} parent=103 // pred_fallthru
          _
        // Predicated region
        $region109: #{tpu_custom_call.1} parent=103 // pred_check
          %p1871 = pneg %p352
        $region110: #{tpu_custom_call.1} parent=103 // pred_check_branch
          %1873 = sbr.rel (%p1871) target = $region112
        $region111: #{tpu_custom_call.1} parent=103 // pred_region
          %s1874 = sand.u32 %s337, 1
          %s1875 = scalar_lea.sflag [#allocation16], %s1874
          %s1876 = sand.u32 %s337, 1
          %s1877 = smul.addr %s1876, 32
          %s1878 = scalar_lea.vmem [#allocation15], %s1877
          %1879 = dma.done %s1875, 512
        $region112: #{tpu_custom_call.1} parent=103 // pred_fallthru
          _
      $region104: #{tpu_custom_call.1} parent=5 // pred_fallthru
        _
    $region6: #{tpu_custom_call.1} parent=1 // loop_footer
      %s37 = sadd.s32 1, %s33
    $region7: #{tpu_custom_call.1} parent=1 // loop_footer_branch
      %32 = sbr.rel target = $region3
    $region8: #{tpu_custom_call.1} parent=1 // loop_exit
      _
    %1880 = vsyncpa [#allocation3], 1
    %s1881 = scalar_lea.sflag [#allocation3], 1
    %1882 = vsyncpa %s1881, 1
    %1883 = vsyncpa [#allocation6], 1
    %s1884 = scalar_lea.sflag [#allocation6], 1
    %1885 = vsyncpa %s1884, 1
    %1886 = vsyncpa [#allocation9], 1
    %1887 = vsyncpa [#allocation12], 1
    %1888 = vsyncpa [#allocation4], 1
    %s1889 = scalar_lea.sflag [#allocation4], 1
    %1890 = vsyncpa %s1889, 1
    %1891 = vsyncpa [#allocation16], 1
    %s1892 = scalar_lea.sflag [#allocation16], 1
    %1893 = vsyncpa %s1892, 1

</llo_original>
